<compile_context>
chip_gen: v6e
topology: v6e:2x2x1
jax: 0.10.0
libtpu: 0.0.40
codegen_flags: <defaults>
</compile_context>

<pallas_src>
import math
import jax
import jax.numpy as jnp
from jax import lax
from jax.experimental import pallas as pl
from jax.experimental.pallas import tpu as pltpu

START_IDX = (20, 23, 26, 29, 32, 35)
END_IDX = (21, 24, 27, 30, 33, 36)
NUM_SEL = len(START_IDX)          # 6
SEL_PAD = 128                     # lane-dense output width (valid entries in lanes 0..5)

# contraction on the last axis of both operands (A @ B^T without an explicit transpose)
_DN_LAST_LAST = (((1,), (1,)), ((), ()))


# ---------------------------------------------------------------------------
# Fused kernel: masked self-attention + QA head + fixed-position gather
#               + log_softmax, one batch element per grid step.
# ---------------------------------------------------------------------------
def fused_mrc_kernel(x_ref, bias_ref, wq_ref, wk_ref, wv_ref, ws_ref, we_ref,
                     sel_s_ref, sel_e_ref, out_s_ref, out_e_ref):
    # x_ref:       (1, S, H) bf16   embeddings for one batch element
    # bias_ref:    (1, 1, S) f32    additive attention-mask bias (0 keep / -1e9 pad)
    # wq/wk/wv:    (H, H)    bf16   attention projections
    # ws/we:       (1, H)    bf16   QA-head start/end weight rows (bias cancels in log_softmax)
    # sel_s/sel_e: (S, SEL_PAD) f32 one-hot selectors: position p_j -> lane j
    # out_s/out_e: (1, 1, SEL_PAD) f32 log_softmax rows; valid values in lanes 0..NUM_SEL-1
    x = x_ref[0]                                   # (S, H) bf16
    bias = bias_ref[0]                             # (1, S) f32
    H = x.shape[-1]
    inv_sqrt_h = 1.0 / math.sqrt(H)

    q = jnp.dot(x, wq_ref[...], preferred_element_type=jnp.float32)   # (S, H) f32
    k = jnp.dot(x, wk_ref[...], preferred_element_type=jnp.float32)   # (S, H) f32
    v = jnp.dot(x, wv_ref[...], preferred_element_type=jnp.float32)   # (S, H) f32

    # scores = q @ k^T: contract last dims of both operands (no XLU transpose of k).
    scores = lax.dot_general(q.astype(jnp.bfloat16), k.astype(jnp.bfloat16),
                             _DN_LAST_LAST, preferred_element_type=jnp.float32)
    scores = scores * inv_sqrt_h + bias            # (S, S); mask bias broadcasts over rows

    m = jnp.max(scores, axis=-1, keepdims=True)
    p = jnp.exp(scores - m)
    attn = p * pl.reciprocal(jnp.sum(p, axis=-1, keepdims=True), approx=True)

    ctx = jnp.dot(attn.astype(jnp.bfloat16), v.astype(jnp.bfloat16),
                  preferred_element_type=jnp.float32)                 # (S, H) f32
    h = x.astype(jnp.float32) + ctx                                   # residual
    h_bf = h.astype(jnp.bfloat16)

    # QA head restricted to what the module actually uses: one logit row per head
    # (contract last dims again), then gather the 6 fixed positions into lanes 0..5
    # via a one-hot matmul so the output store is lane-dense.
    row_s = lax.dot_general(ws_ref[...], h_bf, _DN_LAST_LAST,
                            preferred_element_type=jnp.float32)       # (1, S)
    row_e = lax.dot_general(we_ref[...], h_bf, _DN_LAST_LAST,
                            preferred_element_type=jnp.float32)       # (1, S)
    g_s = jnp.dot(row_s, sel_s_ref[...], preferred_element_type=jnp.float32)  # (1, SEL_PAD)
    g_e = jnp.dot(row_e, sel_e_ref[...], preferred_element_type=jnp.float32)  # (1, SEL_PAD)

    lane = lax.broadcasted_iota(jnp.int32, (1, SEL_PAD), 1)
    pad_bias = jnp.where(lane < NUM_SEL, jnp.float32(0.0), jnp.float32(-1e30))

    def log_softmax_row(z):
        zm = z + pad_bias                           # padded lanes -> -1e30 (exp -> 0)
        mx = jnp.max(zm, axis=-1, keepdims=True)
        e = jnp.exp(zm - mx)
        lse = mx + jnp.log(jnp.sum(e, axis=-1, keepdims=True))
        return zm - lse

    out_s_ref[0] = log_softmax_row(g_s)
    out_e_ref[0] = log_softmax_row(g_e)


# ---------------------------------------------------------------------------
# Params / wrapper
# ---------------------------------------------------------------------------
def init_params(key, vocab, S, H):
    ks = jax.random.split(key, 7)
    scale = 0.02
    return {
        "word_emb": jax.random.normal(ks[0], (vocab, H), jnp.float32) * scale,
        "pos_emb":  jax.random.normal(ks[1], (S, H), jnp.float32) * scale,
        "wq": jax.random.normal(ks[2], (H, H), jnp.float32) * scale,
        "wk": jax.random.normal(ks[3], (H, H), jnp.float32) * scale,
        "wv": jax.random.normal(ks[4], (H, H), jnp.float32) * scale,
        "wqa": jax.random.normal(ks[5], (H, 2), jnp.float32) * scale,
        # bqa exists in a real QA head, but a per-head constant bias is added to all 6
        # gathered logits and therefore cancels under log_softmax -> never sent to the kernel.
        "bqa": jax.random.normal(ks[6], (1, 2), jnp.float32) * scale,
    }


def _one_hot_selector(positions, S):
    sel = jnp.zeros((S, SEL_PAD), jnp.float32)
    return sel.at[jnp.array(positions), jnp.arange(len(positions))].set(1.0)


def roberta_mrc_forward(params, input_ids, attention_mask):
    B, S = input_ids.shape
    H = params["word_emb"].shape[1]

    # --- glue: embedding lookup (synthetic stand-in for the RoBERTa embeddings) ---
    x = jnp.take(params["word_emb"], input_ids, axis=0) + params["pos_emb"][None, :, :]
    x = x.astype(jnp.bfloat16)                                        # (B, S, H) bf16
    bias = ((attention_mask.astype(jnp.float32) - 1.0) * 1e9).reshape(B, 1, S)

    wq = params["wq"].astype(jnp.bfloat16)
    wk = params["wk"].astype(jnp.bfloat16)
    wv = params["wv"].astype(jnp.bfloat16)
    w_s = params["wqa"][:, 0].reshape(1, H).astype(jnp.bfloat16)
    w_e = params["wqa"][:, 1].reshape(1, H).astype(jnp.bfloat16)
    sel_s = _one_hot_selector(START_IDX, S)
    sel_e = _one_hot_selector(END_IDX, S)

    const = lambda b: (0, 0)
    out_s, out_e = pl.pallas_call(
        fused_mrc_kernel,
        out_shape=(jax.ShapeDtypeStruct((B, 1, SEL_PAD), jnp.float32),
                   jax.ShapeDtypeStruct((B, 1, SEL_PAD), jnp.float32)),
        grid_spec=pltpu.PrefetchScalarGridSpec(
            num_scalar_prefetch=0,
            grid=(B,),
            in_specs=[
                pl.BlockSpec((1, S, H), lambda b: (b, 0, 0)),   # x
                pl.BlockSpec((1, 1, S), lambda b: (b, 0, 0)),   # mask bias
                pl.BlockSpec((H, H), const),                    # wq
                pl.BlockSpec((H, H), const),                    # wk
                pl.BlockSpec((H, H), const),                    # wv
                pl.BlockSpec((1, H), const),                    # w_start
                pl.BlockSpec((1, H), const),                    # w_end
                pl.BlockSpec((S, SEL_PAD), const),              # sel_start
                pl.BlockSpec((S, SEL_PAD), const),              # sel_end
            ],
            out_specs=[
                pl.BlockSpec((1, 1, SEL_PAD), lambda b: (b, 0, 0)),
                pl.BlockSpec((1, 1, SEL_PAD), lambda b: (b, 0, 0)),
            ],
        ),
        compiler_params=pltpu.CompilerParams(
            # v7x: the two TensorCores split the batch; on 1-TC v5e/v6e this is just
            # two cheap sequential grid steps at B=2.
            dimension_semantics=("parallel",)),
    )(x, bias, wq, wk, wv, w_s, w_e, sel_s, sel_e)

    return out_s[:, 0, :NUM_SEL], out_e[:, 0, :NUM_SEL]


# ---------------------------------------------------------------------------
# Pure-JAX reference of the same synthetic model (for a correctness check).
# ---------------------------------------------------------------------------
def reference_forward(params, input_ids, attention_mask):
    H = params["word_emb"].shape[1]
    bf = lambda a: a.astype(jnp.bfloat16).astype(jnp.float32)
    x = bf(jnp.take(params["word_emb"], input_ids, axis=0) + params["pos_emb"][None, :, :])
    wq, wk, wv, wqa = bf(params["wq"]), bf(params["wk"]), bf(params["wv"]), bf(params["wqa"])
    q = jnp.einsum("bsh,hk->bsk", x, wq)
    k = jnp.einsum("bsh,hk->bsk", x, wk)
    v = jnp.einsum("bsh,hk->bsk", x, wv)
    bias = (attention_mask.astype(jnp.float32) - 1.0) * 1e9
    scores = jnp.einsum("bqh,bkh->bqk", q, k) / math.sqrt(H) + bias[:, None, :]
    attn = jax.nn.softmax(scores, axis=-1)
    h = x + jnp.einsum("bqk,bkh->bqh", attn, v)
    start_all = jnp.einsum("bsh,h->bs", h, wqa[:, 0])
    end_all = jnp.einsum("bsh,h->bs", h, wqa[:, 1])
    s_sel = start_all[:, jnp.array(START_IDX)]
    e_sel = end_all[:, jnp.array(END_IDX)]
    return jax.nn.log_softmax(s_sel, axis=1), jax.nn.log_softmax(e_sel, axis=1)


if __name__ == "__main__":
    B, S, H, VOCAB = 2, 128, 128, 100   # S > 36 so the fixed gather indices are valid;
                                        # S = H = 128 keeps every tile lane-dense.

    key = jax.random.PRNGKey(0)
    k_par, k_ids = jax.random.split(key)
    params = init_params(k_par, VOCAB, S, H)

    input_ids = jax.random.randint(k_ids, (B, S), 0, VOCAB, dtype=jnp.int32)
    attention_mask = jnp.ones((B, S), jnp.int32).at[1, 100:].set(0)   # pad tail of sample 1

    fwd = jax.jit(roberta_mrc_forward)
    pred_start, pred_end = fwd(params, input_ids, attention_mask)
    jax.block_until_ready((pred_start, pred_end))

    assert pred_start.shape == (B, NUM_SEL) and pred_end.shape == (B, NUM_SEL)
    # log_softmax rows must sum to 1 in probability space
    assert bool(jnp.allclose(jnp.sum(jnp.exp(pred_start), axis=1), 1.0, atol=1e-4))
    assert bool(jnp.allclose(jnp.sum(jnp.exp(pred_end), axis=1), 1.0, atol=1e-4))

    # match the pure-JAX reference of the same synthetic model (loose tol: bf16 matmuls)
    ref_start, ref_end = reference_forward(params, input_ids, attention_mask)
    assert bool(jnp.allclose(pred_start, ref_start, atol=1e-2))
    assert bool(jnp.allclose(pred_end, ref_end, atol=1e-2))

    print("KERNEL_OK")
</pallas_src>

<mosaic_0001>
module attributes {stable_mosaic.version = 11 : i64} {
  func.func @fused_mrc_kernel(%arg0: i32, %arg1: memref<1x128x128xbf16, #tpu.memory_space<vmem>>, %arg2: memref<1x1x128xf32, #tpu.memory_space<vmem>>, %arg3: memref<128x128xbf16, #tpu.memory_space<vmem>>, %arg4: memref<128x128xbf16, #tpu.memory_space<vmem>>, %arg5: memref<128x128xbf16, #tpu.memory_space<vmem>>, %arg6: memref<1x128xbf16, #tpu.memory_space<vmem>>, %arg7: memref<1x128xbf16, #tpu.memory_space<vmem>>, %arg8: memref<128x128xf32, #tpu.memory_space<vmem>>, %arg9: memref<128x128xf32, #tpu.memory_space<vmem>>, %arg10: memref<1x1x128xf32, #tpu.memory_space<vmem>>, %arg11: memref<1x1x128xf32, #tpu.memory_space<vmem>>) attributes {dimension_semantics = [#tpu.dimension_semantics<parallel>], iteration_bounds = array<i64: 2>, scalar_prefetch = 0 : i64, scratch_operands = 0 : i64, tpu.core_type = #tpu.core_type<tc>, window_params = [{transform_indices = @transform_0, window_bounds = array<i64: 1, 128, 128>}, {transform_indices = @transform_1, window_bounds = array<i64: 1, 1, 128>}, {pipeline_mode = #tpu.pipeline_mode<synchronous>, transform_indices = @transform_2, window_bounds = array<i64: 128, 128>}, {pipeline_mode = #tpu.pipeline_mode<synchronous>, transform_indices = @transform_3, window_bounds = array<i64: 128, 128>}, {pipeline_mode = #tpu.pipeline_mode<synchronous>, transform_indices = @transform_4, window_bounds = array<i64: 128, 128>}, {pipeline_mode = #tpu.pipeline_mode<synchronous>, transform_indices = @transform_5, window_bounds = array<i64: 1, 128>}, {pipeline_mode = #tpu.pipeline_mode<synchronous>, transform_indices = @transform_6, window_bounds = array<i64: 1, 128>}, {pipeline_mode = #tpu.pipeline_mode<synchronous>, transform_indices = @transform_7, window_bounds = array<i64: 128, 128>}, {pipeline_mode = #tpu.pipeline_mode<synchronous>, transform_indices = @transform_8, window_bounds = array<i64: 128, 128>}, {transform_indices = @transform_9, window_bounds = array<i64: 1, 1, 128>}, {transform_indices = @transform_10, window_bounds = array<i64: 1, 1, 128>}]} {
    %c0 = arith.constant 0 : index
    %c0_0 = arith.constant 0 : index
    %c0_1 = arith.constant 0 : index
    %0 = vector.load %arg1[%c0, %c0_0, %c0_1] : memref<1x128x128xbf16, #tpu.memory_space<vmem>>, vector<1x128x128xbf16>
    %1 = vector.shape_cast %0 : vector<1x128x128xbf16> to vector<128x128xbf16>
    %c0_2 = arith.constant 0 : index
    %c0_3 = arith.constant 0 : index
    %c0_4 = arith.constant 0 : index
    %2 = vector.load %arg2[%c0_2, %c0_3, %c0_4] : memref<1x1x128xf32, #tpu.memory_space<vmem>>, vector<1x1x128xf32>
    %3 = vector.shape_cast %2 : vector<1x1x128xf32> to vector<1x128xf32>
    %c0_5 = arith.constant 0 : index
    %c0_6 = arith.constant 0 : index
    %4 = vector.load %arg3[%c0_5, %c0_6] : memref<128x128xbf16, #tpu.memory_space<vmem>>, vector<128x128xbf16>
    %cst = arith.constant dense<0.000000e+00> : vector<128x128xf32>
    %5 = tpu.matmul %1, %4, %cst {dimension_numbers = #tpu.dot_dimension_numbers<[1], [0], [0], [1], [0, 0, 1, 1], [], []>} : vector<128x128xbf16>, vector<128x128xbf16>, vector<128x128xf32> -> vector<128x128xf32>
    %c0_7 = arith.constant 0 : index
    %c0_8 = arith.constant 0 : index
    %6 = vector.load %arg4[%c0_7, %c0_8] : memref<128x128xbf16, #tpu.memory_space<vmem>>, vector<128x128xbf16>
    %cst_9 = arith.constant dense<0.000000e+00> : vector<128x128xf32>
    %7 = tpu.matmul %1, %6, %cst_9 {dimension_numbers = #tpu.dot_dimension_numbers<[1], [0], [0], [1], [0, 0, 1, 1], [], []>} : vector<128x128xbf16>, vector<128x128xbf16>, vector<128x128xf32> -> vector<128x128xf32>
    %c0_10 = arith.constant 0 : index
    %c0_11 = arith.constant 0 : index
    %8 = vector.load %arg5[%c0_10, %c0_11] : memref<128x128xbf16, #tpu.memory_space<vmem>>, vector<128x128xbf16>
    %cst_12 = arith.constant dense<0.000000e+00> : vector<128x128xf32>
    %9 = tpu.matmul %1, %8, %cst_12 {dimension_numbers = #tpu.dot_dimension_numbers<[1], [0], [0], [1], [0, 0, 1, 1], [], []>} : vector<128x128xbf16>, vector<128x128xbf16>, vector<128x128xf32> -> vector<128x128xf32>
    %10 = arith.truncf %5 : vector<128x128xf32> to vector<128x128xbf16>
    %11 = arith.truncf %7 : vector<128x128xf32> to vector<128x128xbf16>
    %cst_13 = arith.constant dense<0.000000e+00> : vector<128x128xf32>
    %12 = tpu.matmul %10, %11, %cst_13 {dimension_numbers = #tpu.dot_dimension_numbers<[1], [1], [0], [0], [0, 0, 1, 0], [], []>} : vector<128x128xbf16>, vector<128x128xbf16>, vector<128x128xf32> -> vector<128x128xf32>
    %cst_14 = arith.constant 0.0883883461 : f32
    %13 = vector.broadcast %cst_14 : f32 to vector<128x128xf32>
    %14 = arith.mulf %12, %13 : vector<128x128xf32>
    %15 = vector.broadcast %3 : vector<1x128xf32> to vector<128x128xf32>
    %16 = arith.addf %14, %15 : vector<128x128xf32>
    %cst_15 = arith.constant dense<0xFF800000> : vector<128xf32>
    %17 = vector.multi_reduction <maximumf>, %16, %cst_15 [1] : vector<128x128xf32> to vector<128xf32>
    %18 = vector.shape_cast %17 : vector<128xf32> to vector<128x1xf32>
    %19 = vector.broadcast %18 : vector<128x1xf32> to vector<128x128xf32>
    %20 = arith.subf %16, %19 : vector<128x128xf32>
    %21 = math.exp %20 : vector<128x128xf32>
    %cst_16 = arith.constant dense<0.000000e+00> : vector<128xf32>
    %22 = vector.multi_reduction <add>, %21, %cst_16 [1] : vector<128x128xf32> to vector<128xf32>
    %23 = vector.shape_cast %22 : vector<128xf32> to vector<128x1xf32>
    %24 = tpu.reciprocal %23 {approx = true} : vector<128x1xf32> -> vector<128x1xf32>
    %25 = vector.broadcast %24 : vector<128x1xf32> to vector<128x128xf32>
    %26 = arith.mulf %21, %25 : vector<128x128xf32>
    %27 = arith.truncf %26 : vector<128x128xf32> to vector<128x128xbf16>
    %28 = arith.truncf %9 : vector<128x128xf32> to vector<128x128xbf16>
    %cst_17 = arith.constant dense<0.000000e+00> : vector<128x128xf32>
    %29 = tpu.matmul %27, %28, %cst_17 {dimension_numbers = #tpu.dot_dimension_numbers<[1], [0], [0], [1], [0, 0, 1, 1], [], []>} : vector<128x128xbf16>, vector<128x128xbf16>, vector<128x128xf32> -> vector<128x128xf32>
    %30 = arith.extf %1 : vector<128x128xbf16> to vector<128x128xf32>
    %31 = arith.addf %30, %29 : vector<128x128xf32>
    %32 = arith.truncf %31 : vector<128x128xf32> to vector<128x128xbf16>
    %c0_18 = arith.constant 0 : index
    %c0_19 = arith.constant 0 : index
    %33 = vector.load %arg6[%c0_18, %c0_19] : memref<1x128xbf16, #tpu.memory_space<vmem>>, vector<1x128xbf16>
    %cst_20 = arith.constant dense<0.000000e+00> : vector<1x128xf32>
    %34 = tpu.matmul %33, %32, %cst_20 {dimension_numbers = #tpu.dot_dimension_numbers<[1], [1], [0], [0], [0, 0, 1, 0], [], []>} : vector<1x128xbf16>, vector<128x128xbf16>, vector<1x128xf32> -> vector<1x128xf32>
    %c0_21 = arith.constant 0 : index
    %c0_22 = arith.constant 0 : index
    %35 = vector.load %arg7[%c0_21, %c0_22] : memref<1x128xbf16, #tpu.memory_space<vmem>>, vector<1x128xbf16>
    %cst_23 = arith.constant dense<0.000000e+00> : vector<1x128xf32>
    %36 = tpu.matmul %35, %32, %cst_23 {dimension_numbers = #tpu.dot_dimension_numbers<[1], [1], [0], [0], [0, 0, 1, 0], [], []>} : vector<1x128xbf16>, vector<128x128xbf16>, vector<1x128xf32> -> vector<1x128xf32>
    %c0_24 = arith.constant 0 : index
    %c0_25 = arith.constant 0 : index
    %37 = vector.load %arg8[%c0_24, %c0_25] : memref<128x128xf32, #tpu.memory_space<vmem>>, vector<128x128xf32>
    %cst_26 = arith.constant dense<0.000000e+00> : vector<1x128xf32>
    %38 = tpu.matmul %34, %37, %cst_26 {dimension_numbers = #tpu.dot_dimension_numbers<[1], [0], [0], [1], [0, 0, 1, 1], [], []>} : vector<1x128xf32>, vector<128x128xf32>, vector<1x128xf32> -> vector<1x128xf32>
    %c0_27 = arith.constant 0 : index
    %c0_28 = arith.constant 0 : index
    %39 = vector.load %arg9[%c0_27, %c0_28] : memref<128x128xf32, #tpu.memory_space<vmem>>, vector<128x128xf32>
    %cst_29 = arith.constant dense<0.000000e+00> : vector<1x128xf32>
    %40 = tpu.matmul %36, %39, %cst_29 {dimension_numbers = #tpu.dot_dimension_numbers<[1], [0], [0], [1], [0, 0, 1, 1], [], []>} : vector<1x128xf32>, vector<128x128xf32>, vector<1x128xf32> -> vector<1x128xf32>
    %41 = tpu.iota {dimensions = array<i32: 1>} : vector<1x128xi32>
    %c6_i32 = arith.constant 6 : i32
    %42 = vector.broadcast %c6_i32 : i32 to vector<1x128xi32>
    %43 = arith.cmpi slt, %41, %42 : vector<1x128xi32>
    %cst_30 = arith.constant 0.000000e+00 : f32
    %cst_31 = arith.constant -1.000000e+30 : f32
    %44 = vector.broadcast %cst_30 : f32 to vector<1x128xf32>
    %45 = vector.broadcast %cst_31 : f32 to vector<1x128xf32>
    %46 = arith.select %43, %44, %45 : vector<1x128xi1>, vector<1x128xf32>
    %47 = arith.addf %38, %46 : vector<1x128xf32>
    %cst_32 = arith.constant dense<0xFF800000> : vector<1xf32>
    %48 = vector.multi_reduction <maximumf>, %47, %cst_32 [1] : vector<1x128xf32> to vector<1xf32>
    %49 = vector.shape_cast %48 : vector<1xf32> to vector<1x1xf32>
    %50 = vector.broadcast %49 : vector<1x1xf32> to vector<1x128xf32>
    %51 = arith.subf %47, %50 : vector<1x128xf32>
    %52 = math.exp %51 : vector<1x128xf32>
    %cst_33 = arith.constant dense<0.000000e+00> : vector<1xf32>
    %53 = vector.multi_reduction <add>, %52, %cst_33 [1] : vector<1x128xf32> to vector<1xf32>
    %54 = vector.shape_cast %53 : vector<1xf32> to vector<1x1xf32>
    %55 = math.log %54 : vector<1x1xf32>
    %56 = arith.addf %49, %55 : vector<1x1xf32>
    %57 = vector.broadcast %56 : vector<1x1xf32> to vector<1x128xf32>
    %58 = arith.subf %47, %57 : vector<1x128xf32>
    %c0_34 = arith.constant 0 : index
    %c0_35 = arith.constant 0 : index
    %c0_36 = arith.constant 0 : index
    %59 = vector.load %arg10[%c0_34, %c0_35, %c0_36] : memref<1x1x128xf32, #tpu.memory_space<vmem>>, vector<1x1x128xf32>
    %60 = vector.shape_cast %59 : vector<1x1x128xf32> to vector<1x128xf32>
    %61 = vector.shape_cast %58 : vector<1x128xf32> to vector<1x1x128xf32>
    tpu.vector_store %arg10[%c0_34, %c0_35, %c0_36], %61 {strides = array<i32>} : memref<1x1x128xf32, #tpu.memory_space<vmem>>, vector<1x1x128xf32>,
    %62 = arith.addf %40, %46 : vector<1x128xf32>
    %cst_37 = arith.constant dense<0xFF800000> : vector<1xf32>
    %63 = vector.multi_reduction <maximumf>, %62, %cst_37 [1] : vector<1x128xf32> to vector<1xf32>
    %64 = vector.shape_cast %63 : vector<1xf32> to vector<1x1xf32>
    %65 = vector.broadcast %64 : vector<1x1xf32> to vector<1x128xf32>
    %66 = arith.subf %62, %65 : vector<1x128xf32>
    %67 = math.exp %66 : vector<1x128xf32>
    %cst_38 = arith.constant dense<0.000000e+00> : vector<1xf32>
    %68 = vector.multi_reduction <add>, %67, %cst_38 [1] : vector<1x128xf32> to vector<1xf32>
    %69 = vector.shape_cast %68 : vector<1xf32> to vector<1x1xf32>
    %70 = math.log %69 : vector<1x1xf32>
    %71 = arith.addf %64, %70 : vector<1x1xf32>
    %72 = vector.broadcast %71 : vector<1x1xf32> to vector<1x128xf32>
    %73 = arith.subf %62, %72 : vector<1x128xf32>
    %c0_39 = arith.constant 0 : index
    %c0_40 = arith.constant 0 : index
    %c0_41 = arith.constant 0 : index
    %74 = vector.load %arg11[%c0_39, %c0_40, %c0_41] : memref<1x1x128xf32, #tpu.memory_space<vmem>>, vector<1x1x128xf32>
    %75 = vector.shape_cast %74 : vector<1x1x128xf32> to vector<1x128xf32>
    %76 = vector.shape_cast %73 : vector<1x128xf32> to vector<1x1x128xf32>
    tpu.vector_store %arg11[%c0_39, %c0_40, %c0_41], %76 {strides = array<i32>} : memref<1x1x128xf32, #tpu.memory_space<vmem>>, vector<1x1x128xf32>,
    return
  }
  func.func @transform_0(%arg0: i32) -> (i32, i32, i32) {
    %c0_i32 = arith.constant 0 : i32
    %c0_i32_0 = arith.constant 0 : i32
    %c0_i32_1 = arith.constant 0 : i32
    return %arg0, %c0_i32, %c0_i32_0 : i32, i32, i32
  }
  func.func @transform_1(%arg0: i32) -> (i32, i32, i32) {
    %c0_i32 = arith.constant 0 : i32
    %c0_i32_0 = arith.constant 0 : i32
    %c0_i32_1 = arith.constant 0 : i32
    return %arg0, %c0_i32, %c0_i32_0 : i32, i32, i32
  }
  func.func @transform_2(%arg0: i32) -> (i32, i32) {
    %c0_i32 = arith.constant 0 : i32
    %c0_i32_0 = arith.constant 0 : i32
    %c0_i32_1 = arith.constant 0 : i32
    return %c0_i32, %c0_i32_0 : i32, i32
  }
  func.func @transform_3(%arg0: i32) -> (i32, i32) {
    %c0_i32 = arith.constant 0 : i32
    %c0_i32_0 = arith.constant 0 : i32
    %c0_i32_1 = arith.constant 0 : i32
    return %c0_i32, %c0_i32_0 : i32, i32
  }
  func.func @transform_4(%arg0: i32) -> (i32, i32) {
    %c0_i32 = arith.constant 0 : i32
    %c0_i32_0 = arith.constant 0 : i32
    %c0_i32_1 = arith.constant 0 : i32
    return %c0_i32, %c0_i32_0 : i32, i32
  }
  func.func @transform_5(%arg0: i32) -> (i32, i32) {
    %c0_i32 = arith.constant 0 : i32
    %c0_i32_0 = arith.constant 0 : i32
    %c0_i32_1 = arith.constant 0 : i32
    return %c0_i32, %c0_i32_0 : i32, i32
  }
  func.func @transform_6(%arg0: i32) -> (i32, i32) {
    %c0_i32 = arith.constant 0 : i32
    %c0_i32_0 = arith.constant 0 : i32
    %c0_i32_1 = arith.constant 0 : i32
    return %c0_i32, %c0_i32_0 : i32, i32
  }
  func.func @transform_7(%arg0: i32) -> (i32, i32) {
    %c0_i32 = arith.constant 0 : i32
    %c0_i32_0 = arith.constant 0 : i32
    %c0_i32_1 = arith.constant 0 : i32
    return %c0_i32, %c0_i32_0 : i32, i32
  }
  func.func @transform_8(%arg0: i32) -> (i32, i32) {
    %c0_i32 = arith.constant 0 : i32
    %c0_i32_0 = arith.constant 0 : i32
    %c0_i32_1 = arith.constant 0 : i32
    return %c0_i32, %c0_i32_0 : i32, i32
  }
  func.func @transform_9(%arg0: i32) -> (i32, i32, i32) {
    %c0_i32 = arith.constant 0 : i32
    %c0_i32_0 = arith.constant 0 : i32
    %c0_i32_1 = arith.constant 0 : i32
    return %arg0, %c0_i32, %c0_i32_0 : i32, i32, i32
  }
  func.func @transform_10(%arg0: i32) -> (i32, i32, i32) {
    %c0_i32 = arith.constant 0 : i32
    %c0_i32_0 = arith.constant 0 : i32
    %c0_i32_1 = arith.constant 0 : i32
    return %arg0, %c0_i32, %c0_i32_0 : i32, i32, i32
  }
}

</mosaic_0001>

<llo_original>
// kernel: roberta_mrc_forward.1
$region0: #{roberta_mrc_forward.1}
  #allocation0 [shape = 'u32[]', space=smem, size = 0x4, offset = 0x4, fixed_abs, tag = 'smem constant byte address 0x4 - core index']
  #allocation1 [shape = 'u32[144,128]{1,0:T(1,128)}', space=vmem, size = 0x12000, scoped, tag = 'internal scratch']
  %s0 = inlined_call_operand.vmem [shape: bf16[2,128,128], index: 0, kind: input, shape index: {}]
  %s1 = inlined_call_operand.vmem [shape: f32[2,1,128], index: 1, kind: input, shape index: {}]
  %s2 = inlined_call_operand.vmem [shape: bf16[128,128], index: 2, kind: input, shape index: {}]
  %s3 = inlined_call_operand.vmem [shape: bf16[128,128], index: 3, kind: input, shape index: {}]
  %s4 = inlined_call_operand.vmem [shape: bf16[128,128], index: 4, kind: input, shape index: {}]
  %s5 = inlined_call_operand.vmem [shape: bf16[1,128], index: 5, kind: input, shape index: {}]
  %s6 = inlined_call_operand.vmem [shape: bf16[1,128], index: 6, kind: input, shape index: {}]
  %s7 = inlined_call_operand.vmem [shape: f32[128,128], index: 7, kind: input, shape index: {}]
  %s8 = inlined_call_operand.vmem [shape: f32[128,128], index: 8, kind: input, shape index: {}]
  %s9 = inlined_call_operand.hbm [shape: f32[2,1,128], index: 9, kind: output, shape index: {0}]
  %s10 = inlined_call_operand.hbm [shape: f32[2,1,128], index: 10, kind: output, shape index: {1}]
  %11 = xla_tuple %s9, %s10
  %s12 = sld [smem:[#allocation0]]
  $region77: #{roberta_mrc_forward.1} parent=0
    _
  %s14 = ssub.s32 1, %s12
  %s15 = scalar_select 0, %s14, %s12
  $region1: #{roberta_mrc_forward.1} parent=0
    #allocation2 [shape = 'u8[1024]{0}', space=vmem, size = 0x400, scoped, tag = 'output window, operand 0']
    #allocation3 [shape = 's32[2]{0}', space=sflag, size = 0x8, scoped, tag = 'scoped memory for roberta_mrc_forward.1']
    #allocation4 [shape = 'u8[1024]{0}', space=vmem, size = 0x400, scoped, tag = 'output window, operand 1']
    #allocation5 [shape = 's32[2]{0}', space=sflag, size = 0x8, scoped, tag = 'scoped memory for roberta_mrc_forward.1']
    %16 = vsyncpa [#allocation3], 0
    %s17 = scalar_lea.sflag [#allocation3], 1
    %18 = vsyncpa %s17, 0
    %19 = vsyncpa [#allocation5], 0
    %s20 = scalar_lea.sflag [#allocation5], 1
    %21 = vsyncpa %s20, 0
    loop: start=0, step=1, limit=4
    $region2: #{roberta_mrc_forward.1} parent=1 // loop_pre_header
      _
    $region3: #{roberta_mrc_forward.1} parent=1 // loop_header
      %s23 = sphi 0, %s27
      %p24 = scmp.ge.s32.totalorder %s23, 4
      %s33 = sphi 0, %s35
      %s36 = sphi 0, %s33
      %s37 = sphi 0, %s36
      %s53 = sphi 0, %s37
      %s59 = sphi 0, %s61
      %s62 = sphi 0, %s59
      %s63 = sphi 0, %s62
      %s79 = sphi 0, %s63
      %s83 = sphi 0, %s83
      %s85 = sphi 0, %s83
      %s86 = sphi 0, %s85
      %s100 = sphi 0, %s86
      %s104 = sphi 0, %s104
      %s106 = sphi 0, %s104
      %s107 = sphi 0, %s106
      %s121 = sphi 0, %s107
      %s125 = sphi 0, %s125
      %s127 = sphi 0, %s125
      %s128 = sphi 0, %s127
      %s142 = sphi 0, %s128
      %s146 = sphi 0, %s146
      %s148 = sphi 0, %s146
      %s149 = sphi 0, %s148
      %s163 = sphi 0, %s149
      %s167 = sphi 0, %s167
      %s169 = sphi 0, %s167
      %s170 = sphi 0, %s169
      %s184 = sphi 0, %s170
      %s188 = sphi 0, %s188
      %s190 = sphi 0, %s188
      %s191 = sphi 0, %s190
      %s205 = sphi 0, %s191
      %s209 = sphi 0, %s209
      %s211 = sphi 0, %s209
      %s212 = sphi 0, %s211
      %s226 = sphi 0, %s212
      %s232 = sphi 0, %s234
      %s235 = sphi 0, %s232
      %s236 = sphi 0, %s235
      %s252 = sphi 0, %s236
      %s258 = sphi 0, %s260
      %s261 = sphi 0, %s258
      %s262 = sphi 0, %s261
      %s278 = sphi 0, %s262
    $region4: #{roberta_mrc_forward.1} parent=1 // loop_header_branch
      %26 = sbr.rel (%p24) target = $region8
    $region5: #{roberta_mrc_forward.1} parent=1 // loop_body
      %s28 = ssub.s32 %s23, 1
      %s29 = ssub.s32 %s23, 2
      %s30 = sadd.s32 %s23, 1
      %s31 = ssub.s32 %s23, %s30
      %p32 = scmp.eq.s32.totalorder %s31, 0
      %s34 = sadd.s32 %s33, 1
      %s35 = scalar_select %p32, %s33, %s34
      %p38 = pneg %p32
      %p39 = scmp.eq.s32.totalorder %s23, 1
      %p40 = por %p38, %p39
      %p41 = scmp.ne.s32.totalorder %s33, %s36
      %p42 = scmp.eq.s32.totalorder %s23, 0
      %p43 = por %p41, %p42
      %p44 = scmp.ne.s32.totalorder %s33, %s36
      %p45 = scmp.eq.s32.totalorder %s28, 1
      %p46 = por %p44, %p45
      %p47 = scmp.ne.s32.totalorder %s36, %s37
      %p48 = scmp.eq.s32.totalorder %s28, 0
      %p49 = por %p47, %p48
      %p50 = scmp.ne.s32.totalorder %s36, %s37
      %p51 = scmp.eq.s32.totalorder %s29, 1
      %p52 = por %p50, %p51
      %p54 = scmp.ne.s32.totalorder %s37, %s53
      %p55 = scmp.eq.s32.totalorder %s29, 0
      %p56 = por %p54, %p55
      %s57 = ssub.s32 %s23, %s30
      %p58 = scmp.eq.s32.totalorder %s57, 0
      %s60 = sadd.s32 %s59, 1
      %s61 = scalar_select %p58, %s59, %s60
      %p64 = pneg %p58
      %p65 = scmp.eq.s32.totalorder %s23, 1
      %p66 = por %p64, %p65
      %p67 = scmp.ne.s32.totalorder %s59, %s62
      %p68 = scmp.eq.s32.totalorder %s23, 0
      %p69 = por %p67, %p68
      %p70 = scmp.ne.s32.totalorder %s59, %s62
      %p71 = scmp.eq.s32.totalorder %s28, 1
      %p72 = por %p70, %p71
      %p73 = scmp.ne.s32.totalorder %s62, %s63
      %p74 = scmp.eq.s32.totalorder %s28, 0
      %p75 = por %p73, %p74
      %p76 = scmp.ne.s32.totalorder %s62, %s63
      %p77 = scmp.eq.s32.totalorder %s29, 1
      %p78 = por %p76, %p77
      %p80 = scmp.ne.s32.totalorder %s63, %s79
      %p81 = scmp.eq.s32.totalorder %s29, 0
      %p82 = por %p80, %p81
      %s84 = sadd.s32 %s83, 1
      %p87 = scmp.eq.s32.totalorder %s23, 1
      %p88 = scmp.ne.s32.totalorder %s83, %s85
      %p89 = scmp.eq.s32.totalorder %s23, 0
      %p90 = por %p88, %p89
      %p91 = scmp.ne.s32.totalorder %s83, %s85
      %p92 = scmp.eq.s32.totalorder %s28, 1
      %p93 = por %p91, %p92
      %p94 = scmp.ne.s32.totalorder %s85, %s86
      %p95 = scmp.eq.s32.totalorder %s28, 0
      %p96 = por %p94, %p95
      %p97 = scmp.ne.s32.totalorder %s85, %s86
      %p98 = scmp.eq.s32.totalorder %s29, 1
      %p99 = por %p97, %p98
      %p101 = scmp.ne.s32.totalorder %s86, %s100
      %p102 = scmp.eq.s32.totalorder %s29, 0
      %p103 = por %p101, %p102
      %s105 = sadd.s32 %s104, 1
      %p108 = scmp.eq.s32.totalorder %s23, 1
      %p109 = scmp.ne.s32.totalorder %s104, %s106
      %p110 = scmp.eq.s32.totalorder %s23, 0
      %p111 = por %p109, %p110
      %p112 = scmp.ne.s32.totalorder %s104, %s106
      %p113 = scmp.eq.s32.totalorder %s28, 1
      %p114 = por %p112, %p113
      %p115 = scmp.ne.s32.totalorder %s106, %s107
      %p116 = scmp.eq.s32.totalorder %s28, 0
      %p117 = por %p115, %p116
      %p118 = scmp.ne.s32.totalorder %s106, %s107
      %p119 = scmp.eq.s32.totalorder %s29, 1
      %p120 = por %p118, %p119
      %p122 = scmp.ne.s32.totalorder %s107, %s121
      %p123 = scmp.eq.s32.totalorder %s29, 0
      %p124 = por %p122, %p123
      %s126 = sadd.s32 %s125, 1
      %p129 = scmp.eq.s32.totalorder %s23, 1
      %p130 = scmp.ne.s32.totalorder %s125, %s127
      %p131 = scmp.eq.s32.totalorder %s23, 0
      %p132 = por %p130, %p131
      %p133 = scmp.ne.s32.totalorder %s125, %s127
      %p134 = scmp.eq.s32.totalorder %s28, 1
      %p135 = por %p133, %p134
      %p136 = scmp.ne.s32.totalorder %s127, %s128
      %p137 = scmp.eq.s32.totalorder %s28, 0
      %p138 = por %p136, %p137
      %p139 = scmp.ne.s32.totalorder %s127, %s128
      %p140 = scmp.eq.s32.totalorder %s29, 1
      %p141 = por %p139, %p140
      %p143 = scmp.ne.s32.totalorder %s128, %s142
      %p144 = scmp.eq.s32.totalorder %s29, 0
      %p145 = por %p143, %p144
      %s147 = sadd.s32 %s146, 1
      %p150 = scmp.eq.s32.totalorder %s23, 1
      %p151 = scmp.ne.s32.totalorder %s146, %s148
      %p152 = scmp.eq.s32.totalorder %s23, 0
      %p153 = por %p151, %p152
      %p154 = scmp.ne.s32.totalorder %s146, %s148
      %p155 = scmp.eq.s32.totalorder %s28, 1
      %p156 = por %p154, %p155
      %p157 = scmp.ne.s32.totalorder %s148, %s149
      %p158 = scmp.eq.s32.totalorder %s28, 0
      %p159 = por %p157, %p158
      %p160 = scmp.ne.s32.totalorder %s148, %s149
      %p161 = scmp.eq.s32.totalorder %s29, 1
      %p162 = por %p160, %p161
      %p164 = scmp.ne.s32.totalorder %s149, %s163
      %p165 = scmp.eq.s32.totalorder %s29, 0
      %p166 = por %p164, %p165
      %s168 = sadd.s32 %s167, 1
      %p171 = scmp.eq.s32.totalorder %s23, 1
      %p172 = scmp.ne.s32.totalorder %s167, %s169
      %p173 = scmp.eq.s32.totalorder %s23, 0
      %p174 = por %p172, %p173
      %p175 = scmp.ne.s32.totalorder %s167, %s169
      %p176 = scmp.eq.s32.totalorder %s28, 1
      %p177 = por %p175, %p176
      %p178 = scmp.ne.s32.totalorder %s169, %s170
      %p179 = scmp.eq.s32.totalorder %s28, 0
      %p180 = por %p178, %p179
      %p181 = scmp.ne.s32.totalorder %s169, %s170
      %p182 = scmp.eq.s32.totalorder %s29, 1
      %p183 = por %p181, %p182
      %p185 = scmp.ne.s32.totalorder %s170, %s184
      %p186 = scmp.eq.s32.totalorder %s29, 0
      %p187 = por %p185, %p186
      %s189 = sadd.s32 %s188, 1
      %p192 = scmp.eq.s32.totalorder %s23, 1
      %p193 = scmp.ne.s32.totalorder %s188, %s190
      %p194 = scmp.eq.s32.totalorder %s23, 0
      %p195 = por %p193, %p194
      %p196 = scmp.ne.s32.totalorder %s188, %s190
      %p197 = scmp.eq.s32.totalorder %s28, 1
      %p198 = por %p196, %p197
      %p199 = scmp.ne.s32.totalorder %s190, %s191
      %p200 = scmp.eq.s32.totalorder %s28, 0
      %p201 = por %p199, %p200
      %p202 = scmp.ne.s32.totalorder %s190, %s191
      %p203 = scmp.eq.s32.totalorder %s29, 1
      %p204 = por %p202, %p203
      %p206 = scmp.ne.s32.totalorder %s191, %s205
      %p207 = scmp.eq.s32.totalorder %s29, 0
      %p208 = por %p206, %p207
      %s210 = sadd.s32 %s209, 1
      %p213 = scmp.eq.s32.totalorder %s23, 1
      %p214 = scmp.ne.s32.totalorder %s209, %s211
      %p215 = scmp.eq.s32.totalorder %s23, 0
      %p216 = por %p214, %p215
      %p217 = scmp.ne.s32.totalorder %s209, %s211
      %p218 = scmp.eq.s32.totalorder %s28, 1
      %p219 = por %p217, %p218
      %p220 = scmp.ne.s32.totalorder %s211, %s212
      %p221 = scmp.eq.s32.totalorder %s28, 0
      %p222 = por %p220, %p221
      %p223 = scmp.ne.s32.totalorder %s211, %s212
      %p224 = scmp.eq.s32.totalorder %s29, 1
      %p225 = por %p223, %p224
      %p227 = scmp.ne.s32.totalorder %s212, %s226
      %p228 = scmp.eq.s32.totalorder %s29, 0
      %p229 = por %p227, %p228
      %s230 = ssub.s32 %s23, %s30
      %p231 = scmp.eq.s32.totalorder %s230, 0
      %s233 = sadd.s32 %s232, 1
      %s234 = scalar_select %p231, %s232, %s233
      %p237 = pneg %p231
      %p238 = scmp.eq.s32.totalorder %s23, 1
      %p239 = por %p237, %p238
      %p240 = scmp.ne.s32.totalorder %s232, %s235
      %p241 = scmp.eq.s32.totalorder %s23, 0
      %p242 = por %p240, %p241
      %p243 = scmp.ne.s32.totalorder %s232, %s235
      %p244 = scmp.eq.s32.totalorder %s28, 1
      %p245 = por %p243, %p244
      %p246 = scmp.ne.s32.totalorder %s235, %s236
      %p247 = scmp.eq.s32.totalorder %s28, 0
      %p248 = por %p246, %p247
      %p249 = scmp.ne.s32.totalorder %s235, %s236
      %p250 = scmp.eq.s32.totalorder %s29, 1
      %p251 = por %p249, %p250
      %p253 = scmp.ne.s32.totalorder %s236, %s252
      %p254 = scmp.eq.s32.totalorder %s29, 0
      %p255 = por %p253, %p254
      %s256 = ssub.s32 %s23, %s30
      %p257 = scmp.eq.s32.totalorder %s256, 0
      %s259 = sadd.s32 %s258, 1
      %s260 = scalar_select %p257, %s258, %s259
      %p263 = pneg %p257
      %p264 = scmp.eq.s32.totalorder %s23, 1
      %p265 = por %p263, %p264
      %p266 = scmp.ne.s32.totalorder %s258, %s261
      %p267 = scmp.eq.s32.totalorder %s23, 0
      %p268 = por %p266, %p267
      %p269 = scmp.ne.s32.totalorder %s258, %s261
      %p270 = scmp.eq.s32.totalorder %s28, 1
      %p271 = por %p269, %p270
      %p272 = scmp.ne.s32.totalorder %s261, %s262
      %p273 = scmp.eq.s32.totalorder %s28, 0
      %p274 = por %p272, %p273
      %p275 = scmp.ne.s32.totalorder %s261, %s262
      %p276 = scmp.eq.s32.totalorder %s29, 1
      %p277 = por %p275, %p276
      %p279 = scmp.ne.s32.totalorder %s262, %s278
      %p280 = scmp.eq.s32.totalorder %s29, 0
      %p281 = por %p279, %p280
      %p282 = scmp.le.s32.totalorder 1, %s23
      %p283 = scmp.lt.s32.totalorder %s23, 3
      %p284 = pnand %p282, %p283
      %p285 = pneg %p284
      // Predicated region
      $region9: #{roberta_mrc_forward.1} parent=5 // pred_check
        _
      $region10: #{roberta_mrc_forward.1} parent=5 // pred_check_branch
        %287 = sbr.rel (%p284) target = $region12
      $region11: #{roberta_mrc_forward.1} parent=5 // pred_region
        %s288 = ssub.s32 %s23, 1
        // Predicated region
        $region13: #{roberta_mrc_forward.1} parent=11 // pred_check
          %p289 = pneg %p96
        $region14: #{roberta_mrc_forward.1} parent=11 // pred_check_branch
          %291 = sbr.rel (%p289) target = $region16
        $region15: #{roberta_mrc_forward.1} parent=11 // pred_region
          _
        $region16: #{roberta_mrc_forward.1} parent=11 // pred_fallthru
          _
        // Predicated region
        $region17: #{roberta_mrc_forward.1} parent=11 // pred_check
          %p292 = pneg %p117
        $region18: #{roberta_mrc_forward.1} parent=11 // pred_check_branch
          %294 = sbr.rel (%p292) target = $region20
        $region19: #{roberta_mrc_forward.1} parent=11 // pred_region
          _
        $region20: #{roberta_mrc_forward.1} parent=11 // pred_fallthru
          _
        // Predicated region
        $region21: #{roberta_mrc_forward.1} parent=11 // pred_check
          %p295 = pneg %p138
        $region22: #{roberta_mrc_forward.1} parent=11 // pred_check_branch
          %297 = sbr.rel (%p295) target = $region24
        $region23: #{roberta_mrc_forward.1} parent=11 // pred_region
          _
        $region24: #{roberta_mrc_forward.1} parent=11 // pred_fallthru
          _
        // Predicated region
        $region25: #{roberta_mrc_forward.1} parent=11 // pred_check
          %p298 = pneg %p159
        $region26: #{roberta_mrc_forward.1} parent=11 // pred_check_branch
          %300 = sbr.rel (%p298) target = $region28
        $region27: #{roberta_mrc_forward.1} parent=11 // pred_region
          _
        $region28: #{roberta_mrc_forward.1} parent=11 // pred_fallthru
          _
        // Predicated region
        $region29: #{roberta_mrc_forward.1} parent=11 // pred_check
          %p301 = pneg %p180
        $region30: #{roberta_mrc_forward.1} parent=11 // pred_check_branch
          %303 = sbr.rel (%p301) target = $region32
        $region31: #{roberta_mrc_forward.1} parent=11 // pred_region
          _
        $region32: #{roberta_mrc_forward.1} parent=11 // pred_fallthru
          _
        // Predicated region
        $region33: #{roberta_mrc_forward.1} parent=11 // pred_check
          %p304 = pneg %p201
        $region34: #{roberta_mrc_forward.1} parent=11 // pred_check_branch
          %306 = sbr.rel (%p304) target = $region36
        $region35: #{roberta_mrc_forward.1} parent=11 // pred_region
          _
        $region36: #{roberta_mrc_forward.1} parent=11 // pred_fallthru
          _
        // Predicated region
        $region37: #{roberta_mrc_forward.1} parent=11 // pred_check
          %p307 = pneg %p222
        $region38: #{roberta_mrc_forward.1} parent=11 // pred_check_branch
          %309 = sbr.rel (%p307) target = $region40
        $region39: #{roberta_mrc_forward.1} parent=11 // pred_region
          _
        $region40: #{roberta_mrc_forward.1} parent=11 // pred_fallthru
          _
      $region12: #{roberta_mrc_forward.1} parent=5 // pred_fallthru
        _
      %p310 = scmp.lt.s32.totalorder %s23, 2
      // Predicated region
      $region41: #{roberta_mrc_forward.1} parent=5 // pred_check
        %p311 = pneg %p310
      $region42: #{roberta_mrc_forward.1} parent=5 // pred_check_branch
        %313 = sbr.rel (%p311) target = $region44
      $region43: #{roberta_mrc_forward.1} parent=5 // pred_region
        // Predicated region
        $region45: #{roberta_mrc_forward.1} parent=43 // pred_check
          %p314 = pneg %p43
        $region46: #{roberta_mrc_forward.1} parent=43 // pred_check_branch
          %316 = sbr.rel (%p314) target = $region48
        $region47: #{roberta_mrc_forward.1} parent=43 // pred_region
          %p317 = scmp.lt.s32.totalorder %s23, 1
          %s318 = scalar_select %p317, %s23, 1
          %s319 = smul.addr %s318, 16
          %s320 = smul.addr %s319, 4
          %s321 = scalar_lea.vmem %s0, %s320
        $region48: #{roberta_mrc_forward.1} parent=43 // pred_fallthru
          _
        // Predicated region
        $region49: #{roberta_mrc_forward.1} parent=43 // pred_check
          %p322 = pneg %p69
        $region50: #{roberta_mrc_forward.1} parent=43 // pred_check_branch
          %324 = sbr.rel (%p322) target = $region52
        $region51: #{roberta_mrc_forward.1} parent=43 // pred_region
          %p325 = scmp.lt.s32.totalorder %s23, 1
          %s326 = scalar_select %p325, %s23, 1
          %s327 = scalar_lea.vmem %s1, %s326
        $region52: #{roberta_mrc_forward.1} parent=43 // pred_fallthru
          _
      $region44: #{roberta_mrc_forward.1} parent=5 // pred_fallthru
        _
      %p328 = scmp.le.s32.totalorder 1, %s23
      %p329 = scmp.lt.s32.totalorder %s23, 3
      %p330 = pnand %p328, %p329
      %p331 = pneg %p330
      // Predicated region
      $region53: #{roberta_mrc_forward.1} parent=5 // pred_check
        _
      $region54: #{roberta_mrc_forward.1} parent=5 // pred_check_branch
        %333 = sbr.rel (%p330) target = $region56
      $region55: #{roberta_mrc_forward.1} parent=5 // pred_region
        %s334 = ssub.s32 %s23, 1
        %p335 = scmp.lt.s32.totalorder %s28, 1
        %s336 = scalar_select %p335, %s28, 1
        %s337 = smul.addr %s336, 16
        %s338 = smul.addr %s337, 4
        %s339 = scalar_lea.vmem %s0, %s338
        %p340 = pneg %p49
        %p341 = pneg %p46
        %p342 = scmp.lt.s32.totalorder %s28, 1
        %s343 = scalar_select %p342, %s28, 1
        %s344 = scalar_lea.vmem %s1, %s343
        %p345 = pneg %p75
        %p346 = pneg %p72
        %p347 = pneg %p96
        %p348 = pneg %p93
        %p349 = pneg %p117
        %p350 = pneg %p114
        %p351 = pneg %p138
        %p352 = pneg %p135
        %p353 = pneg %p159
        %p354 = pneg %p156
        %p355 = pneg %p180
        %p356 = pneg %p177
        %p357 = pneg %p201
        %p358 = pneg %p198
        %p359 = pneg %p222
        %p360 = pneg %p219
        %p361 = pneg %p248
        %p362 = pneg %p245
        %s363 = sand.u32 %s235, 1
        %s364 = scalar_lea.sflag [#allocation3], %s363
        %s365 = sand.u32 %s235, 1
        %s366 = scalar_lea.vmem [#allocation2], %s365
        %p367 = pneg %p274
        %p368 = pneg %p271
        %s369 = sand.u32 %s261, 1
        %s370 = scalar_lea.sflag [#allocation5], %s369
        %s371 = sand.u32 %s261, 1
        %s372 = scalar_lea.vmem [#allocation4], %s371
        %p373 = scmp.lt.s32.totalorder %s28, 1
        %s374 = scalar_select %p373, %s28, 1
        %s375 = smul.addr %s374, 16
        %s376 = smul.addr %s375, 4
        %s377 = scalar_lea.vmem %s0, %s376
        %p378 = scmp.lt.s32.totalorder %s28, 1
        %s379 = scalar_select %p378, %s28, 1
        %s380 = scalar_lea.vmem %s1, %s379
        %v382 = vld [vmem:[%s377] sm:$0xf]
        %v383 = vld [vmem:[%s377 + $0x4] sm:$0xf]
        %v384 = vld [vmem:[%s377 + $0x8] sm:$0xf]
        %v385 = vld [vmem:[%s377 + $0xc] sm:$0xf]
        %v386 = vld [vmem:[%s377 + $0x10] sm:$0xf]
        %v387 = vld [vmem:[%s377 + $0x14] sm:$0xf]
        %v388 = vld [vmem:[%s377 + $0x18] sm:$0xf]
        %v389 = vld [vmem:[%s377 + $0x1c] sm:$0xf]
        %v390 = vld [vmem:[%s377 + $0x20] sm:$0xf]
        %v391 = vld [vmem:[%s377 + $0x24] sm:$0xf]
        %v392 = vld [vmem:[%s377 + $0x28] sm:$0xf]
        %v393 = vld [vmem:[%s377 + $0x2c] sm:$0xf]
        %v394 = vld [vmem:[%s377 + $0x30] sm:$0xf]
        %v395 = vld [vmem:[%s377 + $0x34] sm:$0xf]
        %v396 = vld [vmem:[%s377 + $0x38] sm:$0xf]
        %v397 = vld [vmem:[%s377 + $0x3c] sm:$0xf]
        %v398 = vld [vmem:[%s380] sm:$0x1]
        %v399 = vld [vmem:[%s2] sm:$0xf]
        %v400 = vld [vmem:[%s2 + $0x4] sm:$0xf]
        %v401 = vld [vmem:[%s2 + $0x8] sm:$0xf]
        %v402 = vld [vmem:[%s2 + $0xc] sm:$0xf]
        %v403 = vld [vmem:[%s2 + $0x10] sm:$0xf]
        %v404 = vld [vmem:[%s2 + $0x14] sm:$0xf]
        %v405 = vld [vmem:[%s2 + $0x18] sm:$0xf]
        %v406 = vld [vmem:[%s2 + $0x1c] sm:$0xf]
        %v407 = vld [vmem:[%s2 + $0x20] sm:$0xf]
        %v408 = vld [vmem:[%s2 + $0x24] sm:$0xf]
        %v409 = vld [vmem:[%s2 + $0x28] sm:$0xf]
        %v410 = vld [vmem:[%s2 + $0x2c] sm:$0xf]
        %v411 = vld [vmem:[%s2 + $0x30] sm:$0xf]
        %v412 = vld [vmem:[%s2 + $0x34] sm:$0xf]
        %v413 = vld [vmem:[%s2 + $0x38] sm:$0xf]
        %v414 = vld [vmem:[%s2 + $0x3c] sm:$0xf]
        %v431 = vunpack.c.l.b16 %v382
        %v432 = vunpack.c.l.b16 %v383
        %v433 = vunpack.c.l.b16 %v384
        %v434 = vunpack.c.l.b16 %v385
        %v435 = vunpack.c.l.b16 %v386
        %v436 = vunpack.c.l.b16 %v387
        %v437 = vunpack.c.l.b16 %v388
        %v438 = vunpack.c.l.b16 %v389
        %v439 = vunpack.c.l.b16 %v390
        %v440 = vunpack.c.l.b16 %v391
        %v441 = vunpack.c.l.b16 %v392
        %v442 = vunpack.c.l.b16 %v393
        %v443 = vunpack.c.l.b16 %v394
        %v444 = vunpack.c.l.b16 %v395
        %v445 = vunpack.c.l.b16 %v396
        %v446 = vunpack.c.l.b16 %v397
        %v447 = vpack.c.b16 %v432, %v431
        %v448 = vpack.c.b16 %v434, %v433
        %v449 = vpack.c.b16 %v436, %v435
        %v450 = vpack.c.b16 %v438, %v437
        %v451 = vpack.c.b16 %v440, %v439
        %v452 = vpack.c.b16 %v442, %v441
        %v453 = vpack.c.b16 %v444, %v443
        %v454 = vpack.c.b16 %v446, %v445
        %v479 = vunpack.c.l.b16 %v399
        %v480 = vunpack.c.l.b16 %v400
        %v481 = vunpack.c.l.b16 %v401
        %v482 = vunpack.c.l.b16 %v402
        %v483 = vunpack.c.l.b16 %v403
        %v484 = vunpack.c.l.b16 %v404
        %v485 = vunpack.c.l.b16 %v405
        %v486 = vunpack.c.l.b16 %v406
        %v487 = vunpack.c.l.b16 %v407
        %v488 = vunpack.c.l.b16 %v408
        %v489 = vunpack.c.l.b16 %v409
        %v490 = vunpack.c.l.b16 %v410
        %v491 = vunpack.c.l.b16 %v411
        %v492 = vunpack.c.l.b16 %v412
        %v493 = vunpack.c.l.b16 %v413
        %v494 = vunpack.c.l.b16 %v414
        %v495 = vpack.c.b16 %v480, %v479
        %v496 = vpack.c.b16 %v482, %v481
        %v497 = vpack.c.b16 %v484, %v483
        %v498 = vpack.c.b16 %v486, %v485
        %v499 = vpack.c.b16 %v488, %v487
        %v500 = vpack.c.b16 %v490, %v489
        %v501 = vpack.c.b16 %v492, %v491
        %v502 = vpack.c.b16 %v494, %v493
        %511 = vmatprep.subr.bf16.mxu0 0
        %512 = vmatpush1.bf16.msra.mxu0 %v502
        %513 = vmatprep.subr.bf16.mxu0 0
        %514 = vmatpush1.bf16.msra.mxu0 %v501
        %515 = vmatprep.subr.bf16.mxu0 0
        %516 = vmatpush1.bf16.msra.mxu0 %v500
        %517 = vmatprep.subr.bf16.mxu0 0
        %518 = vmatpush1.bf16.msra.mxu0 %v499
        %519 = vmatprep.subr.bf16.mxu0 0
        %520 = vmatpush1.bf16.msra.mxu0 %v498
        %521 = vmatprep.subr.bf16.mxu0 0
        %522 = vmatpush1.bf16.msra.mxu0 %v497
        %523 = vmatprep.subr.bf16.mxu0 0
        %524 = vmatpush1.bf16.msra.mxu0 %v496
        %525 = vmatprep.subr.bf16.mxu0 0
        %526 = vmatpush1.bf16.msra.mxu0 %v495
        %527 = vmatprep.subr.bf16.mxu0 0
        %528 = vmatpush2.bf16.msra.mxu0 0
        %529 = vmatprep.subr.bf16.mxu0 0
        %530 = vmatpush2.bf16.msra.mxu0 0
        %531 = vmatprep.subr.bf16.mxu0 0
        %532 = vmatpush2.bf16.msra.mxu0 0
        %533 = vmatprep.subr.bf16.mxu0 0
        %534 = vmatpush2.bf16.msra.mxu0 0
        %535 = vmatprep.subr.bf16.mxu0 0
        %536 = vmatpush2.bf16.msra.mxu0 0
        %537 = vmatprep.subr.bf16.mxu0 0
        %538 = vmatpush2.bf16.msra.mxu0 0
        %539 = vmatprep.subr.bf16.mxu0 0
        %540 = vmatpush2.bf16.msra.mxu0 0
        %541 = vmatprep.subr.bf16.mxu0 0
        %542 = vmatpush2.bf16.msra.mxu0 0
        %543 = vmatprep.mubr.bf16.mxu0 0
        %544 = vmatmul.mubr.bf16.gmra.mxu0 %v447
        %v545 = vpop.f32.mrf.mxu0
        %v546 = vadd.f32 0.0, %v545
        %v547 = vpop.f32.mrf.mxu0
        %v548 = vpop.f32.mrf.mxu0
        %v549 = vadd.f32 0.0, %v548
        %v550 = vpop.f32.mrf.mxu0
        %551 = vmatprep.mubr.bf16.mxu0 0
        %552 = vmatmul.mubr.bf16.gmra.mxu0 %v448
        %v553 = vpop.f32.mrf.mxu0
        %v554 = vadd.f32 0.0, %v553
        %v555 = vpop.f32.mrf.mxu0
        %v556 = vpop.f32.mrf.mxu0
        %v557 = vadd.f32 0.0, %v556
        %v558 = vpop.f32.mrf.mxu0
        %559 = vmatprep.mubr.bf16.mxu0 0
        %560 = vmatmul.mubr.bf16.gmra.mxu0 %v449
        %v561 = vpop.f32.mrf.mxu0
        %v562 = vadd.f32 0.0, %v561
        %v563 = vpop.f32.mrf.mxu0
        %v564 = vpop.f32.mrf.mxu0
        %v565 = vadd.f32 0.0, %v564
        %v566 = vpop.f32.mrf.mxu0
        %567 = vmatprep.mubr.bf16.mxu0 0
        %568 = vmatmul.mubr.bf16.gmra.mxu0 %v450
        %v569 = vpop.f32.mrf.mxu0
        %v570 = vadd.f32 0.0, %v569
        %v571 = vpop.f32.mrf.mxu0
        %v572 = vpop.f32.mrf.mxu0
        %v573 = vadd.f32 0.0, %v572
        %v574 = vpop.f32.mrf.mxu0
        %575 = vmatprep.mubr.bf16.mxu0 0
        %576 = vmatmul.mubr.bf16.gmra.mxu0 %v451
        %v577 = vpop.f32.mrf.mxu0
        %v578 = vadd.f32 0.0, %v577
        %v579 = vpop.f32.mrf.mxu0
        %v580 = vpop.f32.mrf.mxu0
        %v581 = vadd.f32 0.0, %v580
        %v582 = vpop.f32.mrf.mxu0
        %583 = vmatprep.mubr.bf16.mxu0 0
        %584 = vmatmul.mubr.bf16.gmra.mxu0 %v452
        %v585 = vpop.f32.mrf.mxu0
        %v586 = vadd.f32 0.0, %v585
        %v587 = vpop.f32.mrf.mxu0
        %v588 = vpop.f32.mrf.mxu0
        %v589 = vadd.f32 0.0, %v588
        %v590 = vpop.f32.mrf.mxu0
        %591 = vmatprep.mubr.bf16.mxu0 0
        %592 = vmatmul.mubr.bf16.gmra.mxu0 %v453
        %v593 = vpop.f32.mrf.mxu0
        %v594 = vadd.f32 0.0, %v593
        %v595 = vpop.f32.mrf.mxu0
        %v596 = vpop.f32.mrf.mxu0
        %v597 = vadd.f32 0.0, %v596
        %v598 = vpop.f32.mrf.mxu0
        %599 = vmatprep.mubr.bf16.mxu0 0
        %600 = vmatmul.mubr.bf16.gmra.mxu0 %v454
        %v601 = vpop.f32.mrf.mxu0
        %v602 = vadd.f32 0.0, %v601
        %v603 = vpop.f32.mrf.mxu0
        %v604 = vpop.f32.mrf.mxu0
        %v605 = vadd.f32 0.0, %v604
        %v606 = vpop.f32.mrf.mxu0
        %607 = vdwg.mxu0
        %v608 = vld [vmem:[%s3] sm:$0xf]
        %v609 = vld [vmem:[%s3 + $0x4] sm:$0xf]
        %v610 = vld [vmem:[%s3 + $0x8] sm:$0xf]
        %v611 = vld [vmem:[%s3 + $0xc] sm:$0xf]
        %v612 = vld [vmem:[%s3 + $0x10] sm:$0xf]
        %v613 = vld [vmem:[%s3 + $0x14] sm:$0xf]
        %v614 = vld [vmem:[%s3 + $0x18] sm:$0xf]
        %v615 = vld [vmem:[%s3 + $0x1c] sm:$0xf]
        %v616 = vld [vmem:[%s3 + $0x20] sm:$0xf]
        %v617 = vld [vmem:[%s3 + $0x24] sm:$0xf]
        %v618 = vld [vmem:[%s3 + $0x28] sm:$0xf]
        %v619 = vld [vmem:[%s3 + $0x2c] sm:$0xf]
        %v620 = vld [vmem:[%s3 + $0x30] sm:$0xf]
        %v621 = vld [vmem:[%s3 + $0x34] sm:$0xf]
        %v622 = vld [vmem:[%s3 + $0x38] sm:$0xf]
        %v623 = vld [vmem:[%s3 + $0x3c] sm:$0xf]
        %v640 = vunpack.c.l.b16 %v608
        %v641 = vunpack.c.l.b16 %v609
        %v642 = vunpack.c.l.b16 %v610
        %v643 = vunpack.c.l.b16 %v611
        %v644 = vunpack.c.l.b16 %v612
        %v645 = vunpack.c.l.b16 %v613
        %v646 = vunpack.c.l.b16 %v614
        %v647 = vunpack.c.l.b16 %v615
        %v648 = vunpack.c.l.b16 %v616
        %v649 = vunpack.c.l.b16 %v617
        %v650 = vunpack.c.l.b16 %v618
        %v651 = vunpack.c.l.b16 %v619
        %v652 = vunpack.c.l.b16 %v620
        %v653 = vunpack.c.l.b16 %v621
        %v654 = vunpack.c.l.b16 %v622
        %v655 = vunpack.c.l.b16 %v623
        %v656 = vpack.c.b16 %v641, %v640
        %v657 = vpack.c.b16 %v643, %v642
        %v658 = vpack.c.b16 %v645, %v644
        %v659 = vpack.c.b16 %v647, %v646
        %v660 = vpack.c.b16 %v649, %v648
        %v661 = vpack.c.b16 %v651, %v650
        %v662 = vpack.c.b16 %v653, %v652
        %v663 = vpack.c.b16 %v655, %v654
        %672 = vmatprep.subr.bf16.mxu0 0
        %673 = vmatpush1.bf16.msra.mxu0 %v663
        %674 = vmatprep.subr.bf16.mxu0 0
        %675 = vmatpush1.bf16.msra.mxu0 %v662
        %676 = vmatprep.subr.bf16.mxu0 0
        %677 = vmatpush1.bf16.msra.mxu0 %v661
        %678 = vmatprep.subr.bf16.mxu0 0
        %679 = vmatpush1.bf16.msra.mxu0 %v660
        %680 = vmatprep.subr.bf16.mxu0 0
        %681 = vmatpush1.bf16.msra.mxu0 %v659
        %682 = vmatprep.subr.bf16.mxu0 0
        %683 = vmatpush1.bf16.msra.mxu0 %v658
        %684 = vmatprep.subr.bf16.mxu0 0
        %685 = vmatpush1.bf16.msra.mxu0 %v657
        %686 = vmatprep.subr.bf16.mxu0 0
        %687 = vmatpush1.bf16.msra.mxu0 %v656
        %688 = vmatprep.subr.bf16.mxu0 0
        %689 = vmatpush2.bf16.msra.mxu0 0
        %690 = vmatprep.subr.bf16.mxu0 0
        %691 = vmatpush2.bf16.msra.mxu0 0
        %692 = vmatprep.subr.bf16.mxu0 0
        %693 = vmatpush2.bf16.msra.mxu0 0
        %694 = vmatprep.subr.bf16.mxu0 0
        %695 = vmatpush2.bf16.msra.mxu0 0
        %696 = vmatprep.subr.bf16.mxu0 0
        %697 = vmatpush2.bf16.msra.mxu0 0
        %698 = vmatprep.subr.bf16.mxu0 0
        %699 = vmatpush2.bf16.msra.mxu0 0
        %700 = vmatprep.subr.bf16.mxu0 0
        %701 = vmatpush2.bf16.msra.mxu0 0
        %702 = vmatprep.subr.bf16.mxu0 0
        %703 = vmatpush2.bf16.msra.mxu0 0
        %704 = vmatprep.mubr.bf16.mxu0 0
        %705 = vmatmul.mubr.bf16.gmra.mxu0 %v447
        %v706 = vpop.f32.mrf.mxu0
        %v707 = vadd.f32 0.0, %v706
        %v708 = vpop.f32.mrf.mxu0
        %v709 = vpop.f32.mrf.mxu0
        %v710 = vadd.f32 0.0, %v709
        %v711 = vpop.f32.mrf.mxu0
        %712 = vmatprep.mubr.bf16.mxu0 0
        %713 = vmatmul.mubr.bf16.gmra.mxu0 %v448
        %v714 = vpop.f32.mrf.mxu0
        %v715 = vadd.f32 0.0, %v714
        %v716 = vpop.f32.mrf.mxu0
        %v717 = vpop.f32.mrf.mxu0
        %v718 = vadd.f32 0.0, %v717
        %v719 = vpop.f32.mrf.mxu0
        %720 = vmatprep.mubr.bf16.mxu0 0
        %721 = vmatmul.mubr.bf16.gmra.mxu0 %v449
        %v722 = vpop.f32.mrf.mxu0
        %v723 = vadd.f32 0.0, %v722
        %v724 = vpop.f32.mrf.mxu0
        %v725 = vpop.f32.mrf.mxu0
        %v726 = vadd.f32 0.0, %v725
        %v727 = vpop.f32.mrf.mxu0
        %728 = vmatprep.mubr.bf16.mxu0 0
        %729 = vmatmul.mubr.bf16.gmra.mxu0 %v450
        %v730 = vpop.f32.mrf.mxu0
        %v731 = vadd.f32 0.0, %v730
        %v732 = vpop.f32.mrf.mxu0
        %v733 = vpop.f32.mrf.mxu0
        %v734 = vadd.f32 0.0, %v733
        %v735 = vpop.f32.mrf.mxu0
        %736 = vmatprep.mubr.bf16.mxu0 0
        %737 = vmatmul.mubr.bf16.gmra.mxu0 %v451
        %v738 = vpop.f32.mrf.mxu0
        %v739 = vadd.f32 0.0, %v738
        %v740 = vpop.f32.mrf.mxu0
        %v741 = vpop.f32.mrf.mxu0
        %v742 = vadd.f32 0.0, %v741
        %v743 = vpop.f32.mrf.mxu0
        %744 = vmatprep.mubr.bf16.mxu0 0
        %745 = vmatmul.mubr.bf16.gmra.mxu0 %v452
        %v746 = vpop.f32.mrf.mxu0
        %v747 = vadd.f32 0.0, %v746
        %v748 = vpop.f32.mrf.mxu0
        %v749 = vpop.f32.mrf.mxu0
        %v750 = vadd.f32 0.0, %v749
        %v751 = vpop.f32.mrf.mxu0
        %752 = vmatprep.mubr.bf16.mxu0 0
        %753 = vmatmul.mubr.bf16.gmra.mxu0 %v453
        %v754 = vpop.f32.mrf.mxu0
        %v755 = vadd.f32 0.0, %v754
        %v756 = vpop.f32.mrf.mxu0
        %v757 = vpop.f32.mrf.mxu0
        %v758 = vadd.f32 0.0, %v757
        %v759 = vpop.f32.mrf.mxu0
        %760 = vmatprep.mubr.bf16.mxu0 0
        %761 = vmatmul.mubr.bf16.gmra.mxu0 %v454
        %v762 = vpop.f32.mrf.mxu0
        %v763 = vadd.f32 0.0, %v762
        %v764 = vpop.f32.mrf.mxu0
        %v765 = vpop.f32.mrf.mxu0
        %v766 = vadd.f32 0.0, %v765
        %v767 = vpop.f32.mrf.mxu0
        %768 = vdwg.mxu0
        %v769 = vld [vmem:[%s4] sm:$0xf]
        %v770 = vld [vmem:[%s4 + $0x4] sm:$0xf]
        %v771 = vld [vmem:[%s4 + $0x8] sm:$0xf]
        %v772 = vld [vmem:[%s4 + $0xc] sm:$0xf]
        %v773 = vld [vmem:[%s4 + $0x10] sm:$0xf]
        %v774 = vld [vmem:[%s4 + $0x14] sm:$0xf]
        %v775 = vld [vmem:[%s4 + $0x18] sm:$0xf]
        %v776 = vld [vmem:[%s4 + $0x1c] sm:$0xf]
        %v777 = vld [vmem:[%s4 + $0x20] sm:$0xf]
        %v778 = vld [vmem:[%s4 + $0x24] sm:$0xf]
        %v779 = vld [vmem:[%s4 + $0x28] sm:$0xf]
        %v780 = vld [vmem:[%s4 + $0x2c] sm:$0xf]
        %v781 = vld [vmem:[%s4 + $0x30] sm:$0xf]
        %v782 = vld [vmem:[%s4 + $0x34] sm:$0xf]
        %v783 = vld [vmem:[%s4 + $0x38] sm:$0xf]
        %v784 = vld [vmem:[%s4 + $0x3c] sm:$0xf]
        %v801 = vunpack.c.l.b16 %v769
        %v802 = vunpack.c.l.b16 %v770
        %v803 = vunpack.c.l.b16 %v771
        %v804 = vunpack.c.l.b16 %v772
        %v805 = vunpack.c.l.b16 %v773
        %v806 = vunpack.c.l.b16 %v774
        %v807 = vunpack.c.l.b16 %v775
        %v808 = vunpack.c.l.b16 %v776
        %v809 = vunpack.c.l.b16 %v777
        %v810 = vunpack.c.l.b16 %v778
        %v811 = vunpack.c.l.b16 %v779
        %v812 = vunpack.c.l.b16 %v780
        %v813 = vunpack.c.l.b16 %v781
        %v814 = vunpack.c.l.b16 %v782
        %v815 = vunpack.c.l.b16 %v783
        %v816 = vunpack.c.l.b16 %v784
        %v817 = vpack.c.b16 %v802, %v801
        %v818 = vpack.c.b16 %v804, %v803
        %v819 = vpack.c.b16 %v806, %v805
        %v820 = vpack.c.b16 %v808, %v807
        %v821 = vpack.c.b16 %v810, %v809
        %v822 = vpack.c.b16 %v812, %v811
        %v823 = vpack.c.b16 %v814, %v813
        %v824 = vpack.c.b16 %v816, %v815
        %833 = vmatprep.subr.bf16.mxu0 0
        %834 = vmatpush1.bf16.msra.mxu0 %v824
        %835 = vmatprep.subr.bf16.mxu0 0
        %836 = vmatpush1.bf16.msra.mxu0 %v823
        %837 = vmatprep.subr.bf16.mxu0 0
        %838 = vmatpush1.bf16.msra.mxu0 %v822
        %839 = vmatprep.subr.bf16.mxu0 0
        %840 = vmatpush1.bf16.msra.mxu0 %v821
        %841 = vmatprep.subr.bf16.mxu0 0
        %842 = vmatpush1.bf16.msra.mxu0 %v820
        %843 = vmatprep.subr.bf16.mxu0 0
        %844 = vmatpush1.bf16.msra.mxu0 %v819
        %845 = vmatprep.subr.bf16.mxu0 0
        %846 = vmatpush1.bf16.msra.mxu0 %v818
        %847 = vmatprep.subr.bf16.mxu0 0
        %848 = vmatpush1.bf16.msra.mxu0 %v817
        %849 = vmatprep.subr.bf16.mxu0 0
        %850 = vmatpush2.bf16.msra.mxu0 0
        %851 = vmatprep.subr.bf16.mxu0 0
        %852 = vmatpush2.bf16.msra.mxu0 0
        %853 = vmatprep.subr.bf16.mxu0 0
        %854 = vmatpush2.bf16.msra.mxu0 0
        %855 = vmatprep.subr.bf16.mxu0 0
        %856 = vmatpush2.bf16.msra.mxu0 0
        %857 = vmatprep.subr.bf16.mxu0 0
        %858 = vmatpush2.bf16.msra.mxu0 0
        %859 = vmatprep.subr.bf16.mxu0 0
        %860 = vmatpush2.bf16.msra.mxu0 0
        %861 = vmatprep.subr.bf16.mxu0 0
        %862 = vmatpush2.bf16.msra.mxu0 0
        %863 = vmatprep.subr.bf16.mxu0 0
        %864 = vmatpush2.bf16.msra.mxu0 0
        %865 = vmatprep.mubr.bf16.mxu0 0
        %866 = vmatmul.mubr.bf16.gmra.mxu0 %v447
        %v867 = vpop.f32.mrf.mxu0
        %v868 = vadd.f32 0.0, %v867
        %v869 = vpop.f32.mrf.mxu0
        %v870 = vpop.f32.mrf.mxu0
        %v871 = vadd.f32 0.0, %v870
        %v872 = vpop.f32.mrf.mxu0
        %873 = vmatprep.mubr.bf16.mxu0 0
        %874 = vmatmul.mubr.bf16.gmra.mxu0 %v448
        %v875 = vpop.f32.mrf.mxu0
        %v876 = vadd.f32 0.0, %v875
        %v877 = vpop.f32.mrf.mxu0
        %v878 = vpop.f32.mrf.mxu0
        %v879 = vadd.f32 0.0, %v878
        %v880 = vpop.f32.mrf.mxu0
        %881 = vmatprep.mubr.bf16.mxu0 0
        %882 = vmatmul.mubr.bf16.gmra.mxu0 %v449
        %v883 = vpop.f32.mrf.mxu0
        %v884 = vadd.f32 0.0, %v883
        %v885 = vpop.f32.mrf.mxu0
        %v886 = vpop.f32.mrf.mxu0
        %v887 = vadd.f32 0.0, %v886
        %v888 = vpop.f32.mrf.mxu0
        %889 = vmatprep.mubr.bf16.mxu0 0
        %890 = vmatmul.mubr.bf16.gmra.mxu0 %v450
        %v891 = vpop.f32.mrf.mxu0
        %v892 = vadd.f32 0.0, %v891
        %v893 = vpop.f32.mrf.mxu0
        %v894 = vpop.f32.mrf.mxu0
        %v895 = vadd.f32 0.0, %v894
        %v896 = vpop.f32.mrf.mxu0
        %897 = vmatprep.mubr.bf16.mxu0 0
        %898 = vmatmul.mubr.bf16.gmra.mxu0 %v451
        %v899 = vpop.f32.mrf.mxu0
        %v900 = vadd.f32 0.0, %v899
        %v901 = vpop.f32.mrf.mxu0
        %v902 = vpop.f32.mrf.mxu0
        %v903 = vadd.f32 0.0, %v902
        %v904 = vpop.f32.mrf.mxu0
        %905 = vmatprep.mubr.bf16.mxu0 0
        %906 = vmatmul.mubr.bf16.gmra.mxu0 %v452
        %v907 = vpop.f32.mrf.mxu0
        %v908 = vadd.f32 0.0, %v907
        %v909 = vpop.f32.mrf.mxu0
        %v910 = vpop.f32.mrf.mxu0
        %v911 = vadd.f32 0.0, %v910
        %v912 = vpop.f32.mrf.mxu0
        %913 = vmatprep.mubr.bf16.mxu0 0
        %914 = vmatmul.mubr.bf16.gmra.mxu0 %v453
        %v915 = vpop.f32.mrf.mxu0
        %v916 = vadd.f32 0.0, %v915
        %v917 = vpop.f32.mrf.mxu0
        %v918 = vpop.f32.mrf.mxu0
        %v919 = vadd.f32 0.0, %v918
        %v920 = vpop.f32.mrf.mxu0
        %921 = vmatprep.mubr.bf16.mxu0 0
        %922 = vmatmul.mubr.bf16.gmra.mxu0 %v454
        %v923 = vpop.f32.mrf.mxu0
        %v924 = vadd.f32 0.0, %v923
        %v925 = vpop.f32.mrf.mxu0
        %v926 = vpop.f32.mrf.mxu0
        %v927 = vadd.f32 0.0, %v926
        %v928 = vpop.f32.mrf.mxu0
        %929 = vdwg.mxu0
        %v930 = vpack.c.bf16 %v549, %v546
        %v931 = vpack.c.bf16 %v557, %v554
        %v932 = vpack.c.bf16 %v565, %v562
        %v933 = vpack.c.bf16 %v573, %v570
        %v934 = vpack.c.bf16 %v581, %v578
        %v935 = vpack.c.bf16 %v589, %v586
        %v936 = vpack.c.bf16 %v597, %v594
        %v937 = vpack.c.bf16 %v605, %v602
        %v938 = vpack.c.bf16 %v710, %v707
        %v939 = vpack.c.bf16 %v718, %v715
        %v940 = vpack.c.bf16 %v726, %v723
        %v941 = vpack.c.bf16 %v734, %v731
        %v942 = vpack.c.bf16 %v742, %v739
        %v943 = vpack.c.bf16 %v750, %v747
        %v944 = vpack.c.bf16 %v758, %v755
        %v945 = vpack.c.bf16 %v766, %v763
        %946 = vmatprep.subr.bf16.mxu0 0
        %947 = vmatpush1.bf16.xpose.msra.mxu0 %v945
        %948 = vmatprep.subr.bf16.mxu0 0
        %949 = vmatpush1.bf16.xpose.msra.mxu0 %v944
        %950 = vmatprep.subr.bf16.mxu0 0
        %951 = vmatpush1.bf16.xpose.msra.mxu0 %v943
        %952 = vmatprep.subr.bf16.mxu0 0
        %953 = vmatpush1.bf16.xpose.msra.mxu0 %v942
        %954 = vmatprep.subr.bf16.mxu0 0
        %955 = vmatpush1.bf16.xpose.msra.mxu0 %v941
        %956 = vmatprep.subr.bf16.mxu0 0
        %957 = vmatpush1.bf16.xpose.msra.mxu0 %v940
        %958 = vmatprep.subr.bf16.mxu0 0
        %959 = vmatpush1.bf16.xpose.msra.mxu0 %v939
        %960 = vmatprep.subr.bf16.mxu0 0
        %961 = vmatpush1.bf16.xpose.msra.mxu0 %v938
        %962 = vmatprep.subr.bf16.mxu0 0
        %963 = vmatpush2.bf16.xpose.msra.mxu0 0
        %964 = vmatprep.subr.bf16.mxu0 0
        %965 = vmatpush2.bf16.xpose.msra.mxu0 0
        %966 = vmatprep.subr.bf16.mxu0 0
        %967 = vmatpush2.bf16.xpose.msra.mxu0 0
        %968 = vmatprep.subr.bf16.mxu0 0
        %969 = vmatpush2.bf16.xpose.msra.mxu0 0
        %970 = vmatprep.subr.bf16.mxu0 0
        %971 = vmatpush2.bf16.xpose.msra.mxu0 0
        %972 = vmatprep.subr.bf16.mxu0 0
        %973 = vmatpush2.bf16.xpose.msra.mxu0 0
        %974 = vmatprep.subr.bf16.mxu0 0
        %975 = vmatpush2.bf16.xpose.msra.mxu0 0
        %976 = vmatprep.subr.bf16.mxu0 0
        %977 = vmatpush2.bf16.xpose.msra.mxu0 0
        %978 = vmatprep.mubr.bf16.mxu0 0
        %979 = vmatmul.mubr.bf16.gmra.mxu0 %v930
        %v980 = vpop.f32.mrf.mxu0
        %v981 = vadd.f32 0.0, %v980
        %v982 = vpop.f32.mrf.mxu0
        %v983 = vpop.f32.mrf.mxu0
        %v984 = vadd.f32 0.0, %v983
        %v985 = vpop.f32.mrf.mxu0
        %986 = vmatprep.mubr.bf16.mxu0 0
        %987 = vmatmul.mubr.bf16.gmra.mxu0 %v931
        %v988 = vpop.f32.mrf.mxu0
        %v989 = vadd.f32 0.0, %v988
        %v990 = vpop.f32.mrf.mxu0
        %v991 = vpop.f32.mrf.mxu0
        %v992 = vadd.f32 0.0, %v991
        %v993 = vpop.f32.mrf.mxu0
        %994 = vmatprep.mubr.bf16.mxu0 0
        %995 = vmatmul.mubr.bf16.gmra.mxu0 %v932
        %v996 = vpop.f32.mrf.mxu0
        %v997 = vadd.f32 0.0, %v996
        %v998 = vpop.f32.mrf.mxu0
        %v999 = vpop.f32.mrf.mxu0
        %v1000 = vadd.f32 0.0, %v999
        %v1001 = vpop.f32.mrf.mxu0
        %1002 = vmatprep.mubr.bf16.mxu0 0
        %1003 = vmatmul.mubr.bf16.gmra.mxu0 %v933
        %v1004 = vpop.f32.mrf.mxu0
        %v1005 = vadd.f32 0.0, %v1004
        %v1006 = vpop.f32.mrf.mxu0
        %v1007 = vpop.f32.mrf.mxu0
        %v1008 = vadd.f32 0.0, %v1007
        %v1009 = vpop.f32.mrf.mxu0
        %1010 = vmatprep.mubr.bf16.mxu0 0
        %1011 = vmatmul.mubr.bf16.gmra.mxu0 %v934
        %v1012 = vpop.f32.mrf.mxu0
        %v1013 = vadd.f32 0.0, %v1012
        %v1014 = vpop.f32.mrf.mxu0
        %v1015 = vpop.f32.mrf.mxu0
        %v1016 = vadd.f32 0.0, %v1015
        %v1017 = vpop.f32.mrf.mxu0
        %1018 = vmatprep.mubr.bf16.mxu0 0
        %1019 = vmatmul.mubr.bf16.gmra.mxu0 %v935
        %v1020 = vpop.f32.mrf.mxu0
        %v1021 = vadd.f32 0.0, %v1020
        %v1022 = vpop.f32.mrf.mxu0
        %v1023 = vpop.f32.mrf.mxu0
        %v1024 = vadd.f32 0.0, %v1023
        %v1025 = vpop.f32.mrf.mxu0
        %1026 = vmatprep.mubr.bf16.mxu0 0
        %1027 = vmatmul.mubr.bf16.gmra.mxu0 %v936
        %v1028 = vpop.f32.mrf.mxu0
        %v1029 = vadd.f32 0.0, %v1028
        %v1030 = vpop.f32.mrf.mxu0
        %v1031 = vpop.f32.mrf.mxu0
        %v1032 = vadd.f32 0.0, %v1031
        %v1033 = vpop.f32.mrf.mxu0
        %1034 = vmatprep.mubr.bf16.mxu0 0
        %1035 = vmatmul.mubr.bf16.gmra.mxu0 %v937
        %v1036 = vpop.f32.mrf.mxu0
        %v1037 = vadd.f32 0.0, %v1036
        %v1038 = vpop.f32.mrf.mxu0
        %v1039 = vpop.f32.mrf.mxu0
        %v1040 = vadd.f32 0.0, %v1039
        %v1041 = vpop.f32.mrf.mxu0
        %1042 = vdwg.mxu0
        %v1043 = vmul.f32 %v981, 0.088388346
        %v1044 = vmul.f32 %v984, 0.088388346
        %v1045 = vmul.f32 %v989, 0.088388346
        %v1046 = vmul.f32 %v992, 0.088388346
        %v1047 = vmul.f32 %v997, 0.088388346
        %v1048 = vmul.f32 %v1000, 0.088388346
        %v1049 = vmul.f32 %v1005, 0.088388346
        %v1050 = vmul.f32 %v1008, 0.088388346
        %v1051 = vmul.f32 %v1013, 0.088388346
        %v1052 = vmul.f32 %v1016, 0.088388346
        %v1053 = vmul.f32 %v1021, 0.088388346
        %v1054 = vmul.f32 %v1024, 0.088388346
        %v1055 = vmul.f32 %v1029, 0.088388346
        %v1056 = vmul.f32 %v1032, 0.088388346
        %v1057 = vmul.f32 %v1037, 0.088388346
        %v1058 = vmul.f32 %v1040, 0.088388346
        %v1060 = vlaneseq
        %v1061 = vshrl.u32 %v1060, 7
        %v1062 = vsub.s32 0, %v1061
        %v1063 = vrot.slane %v398, %v1062
        %v1065 = vadd.f32 %v1043, %v1063
        %v1066 = vadd.f32 %v1044, %v1063
        %v1067 = vadd.f32 %v1045, %v1063
        %v1068 = vadd.f32 %v1046, %v1063
        %v1069 = vadd.f32 %v1047, %v1063
        %v1070 = vadd.f32 %v1048, %v1063
        %v1071 = vadd.f32 %v1049, %v1063
        %v1072 = vadd.f32 %v1050, %v1063
        %v1073 = vadd.f32 %v1051, %v1063
        %v1074 = vadd.f32 %v1052, %v1063
        %v1075 = vadd.f32 %v1053, %v1063
        %v1076 = vadd.f32 %v1054, %v1063
        %v1077 = vadd.f32 %v1055, %v1063
        %v1078 = vadd.f32 %v1056, %v1063
        %v1079 = vadd.f32 %v1057, %v1063
        %v1080 = vadd.f32 %v1058, %v1063
        %1081 = vmax.xlane.f32.xlu0 %v1065
        %v1082 = vpop.xlane.xlu0 %1081
        %1083 = vmax.xlane.f32.xlu0 %v1066
        %v1084 = vpop.xlane.xlu0 %1083
        %1085 = vmax.xlane.f32.xlu0 %v1067
        %v1086 = vpop.xlane.xlu0 %1085
        %1087 = vmax.xlane.f32.xlu0 %v1068
        %v1088 = vpop.xlane.xlu0 %1087
        %1089 = vmax.xlane.f32.xlu0 %v1069
        %v1090 = vpop.xlane.xlu0 %1089
        %1091 = vmax.xlane.f32.xlu0 %v1070
        %v1092 = vpop.xlane.xlu0 %1091
        %1093 = vmax.xlane.f32.xlu0 %v1071
        %v1094 = vpop.xlane.xlu0 %1093
        %1095 = vmax.xlane.f32.xlu0 %v1072
        %v1096 = vpop.xlane.xlu0 %1095
        %1097 = vmax.xlane.f32.xlu0 %v1073
        %v1098 = vpop.xlane.xlu0 %1097
        %1099 = vmax.xlane.f32.xlu0 %v1074
        %v1100 = vpop.xlane.xlu0 %1099
        %1101 = vmax.xlane.f32.xlu0 %v1075
        %v1102 = vpop.xlane.xlu0 %1101
        %1103 = vmax.xlane.f32.xlu0 %v1076
        %v1104 = vpop.xlane.xlu0 %1103
        %1105 = vmax.xlane.f32.xlu0 %v1077
        %v1106 = vpop.xlane.xlu0 %1105
        %1107 = vmax.xlane.f32.xlu0 %v1078
        %v1108 = vpop.xlane.xlu0 %1107
        %1109 = vmax.xlane.f32.xlu0 %v1079
        %v1110 = vpop.xlane.xlu0 %1109
        %1111 = vmax.xlane.f32.xlu0 %v1080
        %v1112 = vpop.xlane.xlu0 %1111
        %v1113 = vsub.f32 %v1065, %v1082
        %v1114 = vsub.f32 %v1066, %v1084
        %v1115 = vsub.f32 %v1067, %v1086
        %v1116 = vsub.f32 %v1068, %v1088
        %v1117 = vsub.f32 %v1069, %v1090
        %v1118 = vsub.f32 %v1070, %v1092
        %v1119 = vsub.f32 %v1071, %v1094
        %v1120 = vsub.f32 %v1072, %v1096
        %v1121 = vsub.f32 %v1073, %v1098
        %v1122 = vsub.f32 %v1074, %v1100
        %v1123 = vsub.f32 %v1075, %v1102
        %v1124 = vsub.f32 %v1076, %v1104
        %v1125 = vsub.f32 %v1077, %v1106
        %v1126 = vsub.f32 %v1078, %v1108
        %v1127 = vsub.f32 %v1079, %v1110
        %v1128 = vsub.f32 %v1080, %v1112
        %v1129 = vmul.f32 %v1113, 1.442695
        %v1130 = vpow.pop %v1129
        %v1131 = vmul.f32 %v1114, 1.442695
        %v1132 = vpow.pop %v1131
        %v1133 = vmul.f32 %v1115, 1.442695
        %v1134 = vpow.pop %v1133
        %v1135 = vmul.f32 %v1116, 1.442695
        %v1136 = vpow.pop %v1135
        %v1137 = vmul.f32 %v1117, 1.442695
        %v1138 = vpow.pop %v1137
        %v1139 = vmul.f32 %v1118, 1.442695
        %v1140 = vpow.pop %v1139
        %v1141 = vmul.f32 %v1119, 1.442695
        %v1142 = vpow.pop %v1141
        %v1143 = vmul.f32 %v1120, 1.442695
        %v1144 = vpow.pop %v1143
        %v1145 = vmul.f32 %v1121, 1.442695
        %v1146 = vpow.pop %v1145
        %v1147 = vmul.f32 %v1122, 1.442695
        %v1148 = vpow.pop %v1147
        %v1149 = vmul.f32 %v1123, 1.442695
        %v1150 = vpow.pop %v1149
        %v1151 = vmul.f32 %v1124, 1.442695
        %v1152 = vpow.pop %v1151
        %v1153 = vmul.f32 %v1125, 1.442695
        %v1154 = vpow.pop %v1153
        %v1155 = vmul.f32 %v1126, 1.442695
        %v1156 = vpow.pop %v1155
        %v1157 = vmul.f32 %v1127, 1.442695
        %v1158 = vpow.pop %v1157
        %v1159 = vmul.f32 %v1128, 1.442695
        %v1160 = vpow.pop %v1159
        %1161 = vadd.xlane.f32.xlu0 %v1130
        %v1162 = vpop.xlane.xlu0 %1161
        %1163 = vadd.xlane.f32.xlu0 %v1132
        %v1164 = vpop.xlane.xlu0 %1163
        %1165 = vadd.xlane.f32.xlu0 %v1134
        %v1166 = vpop.xlane.xlu0 %1165
        %1167 = vadd.xlane.f32.xlu0 %v1136
        %v1168 = vpop.xlane.xlu0 %1167
        %1169 = vadd.xlane.f32.xlu0 %v1138
        %v1170 = vpop.xlane.xlu0 %1169
        %1171 = vadd.xlane.f32.xlu0 %v1140
        %v1172 = vpop.xlane.xlu0 %1171
        %1173 = vadd.xlane.f32.xlu0 %v1142
        %v1174 = vpop.xlane.xlu0 %1173
        %1175 = vadd.xlane.f32.xlu0 %v1144
        %v1176 = vpop.xlane.xlu0 %1175
        %1177 = vadd.xlane.f32.xlu0 %v1146
        %v1178 = vpop.xlane.xlu0 %1177
        %1179 = vadd.xlane.f32.xlu0 %v1148
        %v1180 = vpop.xlane.xlu0 %1179
        %1181 = vadd.xlane.f32.xlu0 %v1150
        %v1182 = vpop.xlane.xlu0 %1181
        %1183 = vadd.xlane.f32.xlu0 %v1152
        %v1184 = vpop.xlane.xlu0 %1183
        %1185 = vadd.xlane.f32.xlu0 %v1154
        %v1186 = vpop.xlane.xlu0 %1185
        %1187 = vadd.xlane.f32.xlu0 %v1156
        %v1188 = vpop.xlane.xlu0 %1187
        %1189 = vadd.xlane.f32.xlu0 %v1158
        %v1190 = vpop.xlane.xlu0 %1189
        %1191 = vadd.xlane.f32.xlu0 %v1160
        %v1192 = vpop.xlane.xlu0 %1191
        %v1193 = vrcp.pop %v1162
        %v1194 = vrcp.pop %v1164
        %v1195 = vrcp.pop %v1166
        %v1196 = vrcp.pop %v1168
        %v1197 = vrcp.pop %v1170
        %v1198 = vrcp.pop %v1172
        %v1199 = vrcp.pop %v1174
        %v1200 = vrcp.pop %v1176
        %v1201 = vrcp.pop %v1178
        %v1202 = vrcp.pop %v1180
        %v1203 = vrcp.pop %v1182
        %v1204 = vrcp.pop %v1184
        %v1205 = vrcp.pop %v1186
        %v1206 = vrcp.pop %v1188
        %v1207 = vrcp.pop %v1190
        %v1208 = vrcp.pop %v1192
        %v1209 = vmul.f32 %v1130, %v1193
        %v1210 = vmul.f32 %v1132, %v1194
        %v1211 = vmul.f32 %v1134, %v1195
        %v1212 = vmul.f32 %v1136, %v1196
        %v1213 = vmul.f32 %v1138, %v1197
        %v1214 = vmul.f32 %v1140, %v1198
        %v1215 = vmul.f32 %v1142, %v1199
        %v1216 = vmul.f32 %v1144, %v1200
        %v1217 = vmul.f32 %v1146, %v1201
        %v1218 = vmul.f32 %v1148, %v1202
        %v1219 = vmul.f32 %v1150, %v1203
        %v1220 = vmul.f32 %v1152, %v1204
        %v1221 = vmul.f32 %v1154, %v1205
        %v1222 = vmul.f32 %v1156, %v1206
        %v1223 = vmul.f32 %v1158, %v1207
        %v1224 = vmul.f32 %v1160, %v1208
        %v1225 = vpack.c.bf16 %v1210, %v1209
        %v1226 = vpack.c.bf16 %v1212, %v1211
        %v1227 = vpack.c.bf16 %v1214, %v1213
        %v1228 = vpack.c.bf16 %v1216, %v1215
        %v1229 = vpack.c.bf16 %v1218, %v1217
        %v1230 = vpack.c.bf16 %v1220, %v1219
        %v1231 = vpack.c.bf16 %v1222, %v1221
        %v1232 = vpack.c.bf16 %v1224, %v1223
        %v1233 = vpack.c.bf16 %v871, %v868
        %v1234 = vpack.c.bf16 %v879, %v876
        %v1235 = vpack.c.bf16 %v887, %v884
        %v1236 = vpack.c.bf16 %v895, %v892
        %v1237 = vpack.c.bf16 %v903, %v900
        %v1238 = vpack.c.bf16 %v911, %v908
        %v1239 = vpack.c.bf16 %v919, %v916
        %v1240 = vpack.c.bf16 %v927, %v924
        %1241 = vmatprep.subr.bf16.mxu0 0
        %1242 = vmatpush1.bf16.msra.mxu0 %v1240
        %1243 = vmatprep.subr.bf16.mxu0 0
        %1244 = vmatpush1.bf16.msra.mxu0 %v1239
        %1245 = vmatprep.subr.bf16.mxu0 0
        %1246 = vmatpush1.bf16.msra.mxu0 %v1238
        %1247 = vmatprep.subr.bf16.mxu0 0
        %1248 = vmatpush1.bf16.msra.mxu0 %v1237
        %1249 = vmatprep.subr.bf16.mxu0 0
        %1250 = vmatpush1.bf16.msra.mxu0 %v1236
        %1251 = vmatprep.subr.bf16.mxu0 0
        %1252 = vmatpush1.bf16.msra.mxu0 %v1235
        %1253 = vmatprep.subr.bf16.mxu0 0
        %1254 = vmatpush1.bf16.msra.mxu0 %v1234
        %1255 = vmatprep.subr.bf16.mxu0 0
        %1256 = vmatpush1.bf16.msra.mxu0 %v1233
        %1257 = vmatprep.subr.bf16.mxu0 0
        %1258 = vmatpush2.bf16.msra.mxu0 0
        %1259 = vmatprep.subr.bf16.mxu0 0
        %1260 = vmatpush2.bf16.msra.mxu0 0
        %1261 = vmatprep.subr.bf16.mxu0 0
        %1262 = vmatpush2.bf16.msra.mxu0 0
        %1263 = vmatprep.subr.bf16.mxu0 0
        %1264 = vmatpush2.bf16.msra.mxu0 0
        %1265 = vmatprep.subr.bf16.mxu0 0
        %1266 = vmatpush2.bf16.msra.mxu0 0
        %1267 = vmatprep.subr.bf16.mxu0 0
        %1268 = vmatpush2.bf16.msra.mxu0 0
        %1269 = vmatprep.subr.bf16.mxu0 0
        %1270 = vmatpush2.bf16.msra.mxu0 0
        %1271 = vmatprep.subr.bf16.mxu0 0
        %1272 = vmatpush2.bf16.msra.mxu0 0
        %1273 = vmatprep.mubr.bf16.mxu0 0
        %1274 = vmatmul.mubr.bf16.gmra.mxu0 %v1225
        %v1275 = vpop.f32.mrf.mxu0
        %v1276 = vadd.f32 0.0, %v1275
        %v1277 = vpop.f32.mrf.mxu0
        %v1278 = vpop.f32.mrf.mxu0
        %v1279 = vadd.f32 0.0, %v1278
        %v1280 = vpop.f32.mrf.mxu0
        %1281 = vmatprep.mubr.bf16.mxu0 0
        %1282 = vmatmul.mubr.bf16.gmra.mxu0 %v1226
        %v1283 = vpop.f32.mrf.mxu0
        %v1284 = vadd.f32 0.0, %v1283
        %v1285 = vpop.f32.mrf.mxu0
        %v1286 = vpop.f32.mrf.mxu0
        %v1287 = vadd.f32 0.0, %v1286
        %v1288 = vpop.f32.mrf.mxu0
        %1289 = vmatprep.mubr.bf16.mxu0 0
        %1290 = vmatmul.mubr.bf16.gmra.mxu0 %v1227
        %v1291 = vpop.f32.mrf.mxu0
        %v1292 = vadd.f32 0.0, %v1291
        %v1293 = vpop.f32.mrf.mxu0
        %v1294 = vpop.f32.mrf.mxu0
        %v1295 = vadd.f32 0.0, %v1294
        %v1296 = vpop.f32.mrf.mxu0
        %1297 = vmatprep.mubr.bf16.mxu0 0
        %1298 = vmatmul.mubr.bf16.gmra.mxu0 %v1228
        %v1299 = vpop.f32.mrf.mxu0
        %v1300 = vadd.f32 0.0, %v1299
        %v1301 = vpop.f32.mrf.mxu0
        %v1302 = vpop.f32.mrf.mxu0
        %v1303 = vadd.f32 0.0, %v1302
        %v1304 = vpop.f32.mrf.mxu0
        %1305 = vmatprep.mubr.bf16.mxu0 0
        %1306 = vmatmul.mubr.bf16.gmra.mxu0 %v1229
        %v1307 = vpop.f32.mrf.mxu0
        %v1308 = vadd.f32 0.0, %v1307
        %v1309 = vpop.f32.mrf.mxu0
        %v1310 = vpop.f32.mrf.mxu0
        %v1311 = vadd.f32 0.0, %v1310
        %v1312 = vpop.f32.mrf.mxu0
        %1313 = vmatprep.mubr.bf16.mxu0 0
        %1314 = vmatmul.mubr.bf16.gmra.mxu0 %v1230
        %v1315 = vpop.f32.mrf.mxu0
        %v1316 = vadd.f32 0.0, %v1315
        %v1317 = vpop.f32.mrf.mxu0
        %v1318 = vpop.f32.mrf.mxu0
        %v1319 = vadd.f32 0.0, %v1318
        %v1320 = vpop.f32.mrf.mxu0
        %1321 = vmatprep.mubr.bf16.mxu0 0
        %1322 = vmatmul.mubr.bf16.gmra.mxu0 %v1231
        %v1323 = vpop.f32.mrf.mxu0
        %v1324 = vadd.f32 0.0, %v1323
        %v1325 = vpop.f32.mrf.mxu0
        %v1326 = vpop.f32.mrf.mxu0
        %v1327 = vadd.f32 0.0, %v1326
        %v1328 = vpop.f32.mrf.mxu0
        %1329 = vmatprep.mubr.bf16.mxu0 0
        %1330 = vmatmul.mubr.bf16.gmra.mxu0 %v1232
        %v1331 = vpop.f32.mrf.mxu0
        %v1332 = vadd.f32 0.0, %v1331
        %v1333 = vpop.f32.mrf.mxu0
        %v1334 = vpop.f32.mrf.mxu0
        %v1335 = vadd.f32 0.0, %v1334
        %v1336 = vpop.f32.mrf.mxu0
        %1337 = vdwg.mxu0
        %v1338 = vunpack.c.l.bf16 %v382
        %v1339 = vunpack.c.l.bf16 %v383
        %v1340 = vunpack.c.l.bf16 %v384
        %v1341 = vunpack.c.l.bf16 %v385
        %v1342 = vunpack.c.l.bf16 %v386
        %v1343 = vunpack.c.l.bf16 %v387
        %v1344 = vunpack.c.l.bf16 %v388
        %v1345 = vunpack.c.l.bf16 %v389
        %v1346 = vunpack.c.l.bf16 %v390
        %v1347 = vunpack.c.l.bf16 %v391
        %v1348 = vunpack.c.l.bf16 %v392
        %v1349 = vunpack.c.l.bf16 %v393
        %v1350 = vunpack.c.l.bf16 %v394
        %v1351 = vunpack.c.l.bf16 %v395
        %v1352 = vunpack.c.l.bf16 %v396
        %v1353 = vunpack.c.l.bf16 %v397
        %v1354 = vadd.f32 %v1338, %v1276
        %v1355 = vadd.f32 %v1339, %v1279
        %v1356 = vadd.f32 %v1340, %v1284
        %v1357 = vadd.f32 %v1341, %v1287
        %v1358 = vadd.f32 %v1342, %v1292
        %v1359 = vadd.f32 %v1343, %v1295
        %v1360 = vadd.f32 %v1344, %v1300
        %v1361 = vadd.f32 %v1345, %v1303
        %v1362 = vadd.f32 %v1346, %v1308
        %v1363 = vadd.f32 %v1347, %v1311
        %v1364 = vadd.f32 %v1348, %v1316
        %v1365 = vadd.f32 %v1349, %v1319
        %v1366 = vadd.f32 %v1350, %v1324
        %v1367 = vadd.f32 %v1351, %v1327
        %v1368 = vadd.f32 %v1352, %v1332
        %v1369 = vadd.f32 %v1353, %v1335
        %v1370 = vpack.c.bf16 %v1355, %v1354
        %v1371 = vpack.c.bf16 %v1357, %v1356
        %v1372 = vpack.c.bf16 %v1359, %v1358
        %v1373 = vpack.c.bf16 %v1361, %v1360
        %v1374 = vpack.c.bf16 %v1363, %v1362
        %v1375 = vpack.c.bf16 %v1365, %v1364
        %v1376 = vpack.c.bf16 %v1367, %v1366
        %v1377 = vpack.c.bf16 %v1369, %v1368
        %v1378 = vld [vmem:[%s5] sm:$0x1]
        %1379 = vmatprep.subr.bf16.mxu0 0
        %1380 = vmatpush1.bf16.xpose.msra.mxu0 %v1377
        %1381 = vmatprep.subr.bf16.mxu0 0
        %1382 = vmatpush1.bf16.xpose.msra.mxu0 %v1376
        %1383 = vmatprep.subr.bf16.mxu0 0
        %1384 = vmatpush1.bf16.xpose.msra.mxu0 %v1375
        %1385 = vmatprep.subr.bf16.mxu0 0
        %1386 = vmatpush1.bf16.xpose.msra.mxu0 %v1374
        %1387 = vmatprep.subr.bf16.mxu0 0
        %1388 = vmatpush1.bf16.xpose.msra.mxu0 %v1373
        %1389 = vmatprep.subr.bf16.mxu0 0
        %1390 = vmatpush1.bf16.xpose.msra.mxu0 %v1372
        %1391 = vmatprep.subr.bf16.mxu0 0
        %1392 = vmatpush1.bf16.xpose.msra.mxu0 %v1371
        %1393 = vmatprep.subr.bf16.mxu0 0
        %1394 = vmatpush1.bf16.xpose.msra.mxu0 %v1370
        %1395 = vmatprep.subr.bf16.mxu0 0
        %1396 = vmatpush2.bf16.xpose.msra.mxu0 0
        %1397 = vmatprep.subr.bf16.mxu0 0
        %1398 = vmatpush2.bf16.xpose.msra.mxu0 0
        %1399 = vmatprep.subr.bf16.mxu0 0
        %1400 = vmatpush2.bf16.xpose.msra.mxu0 0
        %1401 = vmatprep.subr.bf16.mxu0 0
        %1402 = vmatpush2.bf16.xpose.msra.mxu0 0
        %1403 = vmatprep.subr.bf16.mxu0 0
        %1404 = vmatpush2.bf16.xpose.msra.mxu0 0
        %1405 = vmatprep.subr.bf16.mxu0 0
        %1406 = vmatpush2.bf16.xpose.msra.mxu0 0
        %1407 = vmatprep.subr.bf16.mxu0 0
        %1408 = vmatpush2.bf16.xpose.msra.mxu0 0
        %1409 = vmatprep.subr.bf16.mxu0 0
        %1410 = vmatpush2.bf16.xpose.msra.mxu0 0
        %1411 = vmatprep.mubr.bf16.mxu0 0
        %1412 = vmatmul.mubr.bf16.gmra.mxu0 %v1378
        %v1413 = vpop.f32.mrf.mxu0
        %v1414 = vadd.f32 0.0, %v1413
        %v1415 = vpop.f32.mrf.mxu0
        %v1416 = vpop.f32.mrf.mxu0
        %v1417 = vpop.f32.mrf.mxu0
        %1418 = vdwg.mxu0
        %v1419 = vld [vmem:[%s6] sm:$0x1]
        %1420 = vmatprep.subr.bf16.mxu0 0
        %1421 = vmatpush1.bf16.xpose.msra.mxu0 %v1377
        %1422 = vmatprep.subr.bf16.mxu0 0
        %1423 = vmatpush1.bf16.xpose.msra.mxu0 %v1376
        %1424 = vmatprep.subr.bf16.mxu0 0
        %1425 = vmatpush1.bf16.xpose.msra.mxu0 %v1375
        %1426 = vmatprep.subr.bf16.mxu0 0
        %1427 = vmatpush1.bf16.xpose.msra.mxu0 %v1374
        %1428 = vmatprep.subr.bf16.mxu0 0
        %1429 = vmatpush1.bf16.xpose.msra.mxu0 %v1373
        %1430 = vmatprep.subr.bf16.mxu0 0
        %1431 = vmatpush1.bf16.xpose.msra.mxu0 %v1372
        %1432 = vmatprep.subr.bf16.mxu0 0
        %1433 = vmatpush1.bf16.xpose.msra.mxu0 %v1371
        %1434 = vmatprep.subr.bf16.mxu0 0
        %1435 = vmatpush1.bf16.xpose.msra.mxu0 %v1370
        %1436 = vmatprep.subr.bf16.mxu0 0
        %1437 = vmatpush2.bf16.xpose.msra.mxu0 0
        %1438 = vmatprep.subr.bf16.mxu0 0
        %1439 = vmatpush2.bf16.xpose.msra.mxu0 0
        %1440 = vmatprep.subr.bf16.mxu0 0
        %1441 = vmatpush2.bf16.xpose.msra.mxu0 0
        %1442 = vmatprep.subr.bf16.mxu0 0
        %1443 = vmatpush2.bf16.xpose.msra.mxu0 0
        %1444 = vmatprep.subr.bf16.mxu0 0
        %1445 = vmatpush2.bf16.xpose.msra.mxu0 0
        %1446 = vmatprep.subr.bf16.mxu0 0
        %1447 = vmatpush2.bf16.xpose.msra.mxu0 0
        %1448 = vmatprep.subr.bf16.mxu0 0
        %1449 = vmatpush2.bf16.xpose.msra.mxu0 0
        %1450 = vmatprep.subr.bf16.mxu0 0
        %1451 = vmatpush2.bf16.xpose.msra.mxu0 0
        %1452 = vmatprep.mubr.bf16.mxu0 0
        %1453 = vmatmul.mubr.bf16.gmra.mxu0 %v1419
        %v1454 = vpop.f32.mrf.mxu0
        %v1455 = vadd.f32 0.0, %v1454
        %v1456 = vpop.f32.mrf.mxu0
        %v1457 = vpop.f32.mrf.mxu0
        %v1458 = vpop.f32.mrf.mxu0
        %1459 = vdwg.mxu0
        %v1460 = vld [vmem:[%s7] sm:$0xff]
        %v1461 = vld [vmem:[%s7 + $0x8] sm:$0xff]
        %v1462 = vld [vmem:[%s7 + $0x10] sm:$0xff]
        %v1463 = vld [vmem:[%s7 + $0x18] sm:$0xff]
        %v1464 = vld [vmem:[%s7 + $0x20] sm:$0xff]
        %v1465 = vld [vmem:[%s7 + $0x28] sm:$0xff]
        %v1466 = vld [vmem:[%s7 + $0x30] sm:$0xff]
        %v1467 = vld [vmem:[%s7 + $0x38] sm:$0xff]
        %v1468 = vld [vmem:[%s7 + $0x40] sm:$0xff]
        %v1469 = vld [vmem:[%s7 + $0x48] sm:$0xff]
        %v1470 = vld [vmem:[%s7 + $0x50] sm:$0xff]
        %v1471 = vld [vmem:[%s7 + $0x58] sm:$0xff]
        %v1472 = vld [vmem:[%s7 + $0x60] sm:$0xff]
        %v1473 = vld [vmem:[%s7 + $0x68] sm:$0xff]
        %v1474 = vld [vmem:[%s7 + $0x70] sm:$0xff]
        %v1475 = vld [vmem:[%s7 + $0x78] sm:$0xff]
        %v1476 = vld [vmem:[%s8] sm:$0xff]
        %v1477 = vld [vmem:[%s8 + $0x8] sm:$0xff]
        %v1478 = vld [vmem:[%s8 + $0x10] sm:$0xff]
        %v1479 = vld [vmem:[%s8 + $0x18] sm:$0xff]
        %v1480 = vld [vmem:[%s8 + $0x20] sm:$0xff]
        %v1481 = vld [vmem:[%s8 + $0x28] sm:$0xff]
        %v1482 = vld [vmem:[%s8 + $0x30] sm:$0xff]
        %v1483 = vld [vmem:[%s8 + $0x38] sm:$0xff]
        %v1484 = vld [vmem:[%s8 + $0x40] sm:$0xff]
        %v1485 = vld [vmem:[%s8 + $0x48] sm:$0xff]
        %v1486 = vld [vmem:[%s8 + $0x50] sm:$0xff]
        %v1487 = vld [vmem:[%s8 + $0x58] sm:$0xff]
        %v1488 = vld [vmem:[%s8 + $0x60] sm:$0xff]
        %v1489 = vld [vmem:[%s8 + $0x68] sm:$0xff]
        %v1490 = vld [vmem:[%s8 + $0x70] sm:$0xff]
        %v1491 = vld [vmem:[%s8 + $0x78] sm:$0xff]
        %v1492 = vlaneseq
        %v1493 = vand.u32 %v1492, 127
        %vm1494 = vcmp.lt.s32.totalorder %v1493, 6
        %v1495 = vsel %vm1494, 0.0, -1e+30
        %1496 = vmatprep.subr.mxu0 0.0
        %1497 = vmatpush1.msra.mxu0 %v1475
        %1498 = vmatprep.subr.mxu0 0.0
        %1499 = vmatpush1.msra.mxu0 %v1474
        %1500 = vmatprep.subr.mxu0 0.0
        %1501 = vmatpush1.msra.mxu0 %v1473
        %1502 = vmatprep.subr.mxu0 0.0
        %1503 = vmatpush1.msra.mxu0 %v1472
        %1504 = vmatprep.subr.mxu0 0.0
        %1505 = vmatpush1.msra.mxu0 %v1471
        %1506 = vmatprep.subr.mxu0 0.0
        %1507 = vmatpush1.msra.mxu0 %v1470
        %1508 = vmatprep.subr.mxu0 0.0
        %1509 = vmatpush1.msra.mxu0 %v1469
        %1510 = vmatprep.subr.mxu0 0.0
        %1511 = vmatpush1.msra.mxu0 %v1468
        %1512 = vmatprep.subr.mxu0 0.0
        %1513 = vmatpush1.msra.mxu0 %v1467
        %1514 = vmatprep.subr.mxu0 0.0
        %1515 = vmatpush1.msra.mxu0 %v1466
        %1516 = vmatprep.subr.mxu0 0.0
        %1517 = vmatpush1.msra.mxu0 %v1465
        %1518 = vmatprep.subr.mxu0 0.0
        %1519 = vmatpush1.msra.mxu0 %v1464
        %1520 = vmatprep.subr.mxu0 0.0
        %1521 = vmatpush1.msra.mxu0 %v1463
        %1522 = vmatprep.subr.mxu0 0.0
        %1523 = vmatpush1.msra.mxu0 %v1462
        %1524 = vmatprep.subr.mxu0 0.0
        %1525 = vmatpush1.msra.mxu0 %v1461
        %1526 = vmatprep.subr.mxu0 0.0
        %1527 = vmatpush1.msra.mxu0 %v1460
        %1528 = vmatprep.subr.mxu0 0.0
        %1529 = vmatpush2.msra.mxu0 0.0
        %1530 = vmatprep.subr.mxu0 0.0
        %1531 = vmatpush2.msra.mxu0 0.0
        %1532 = vmatprep.subr.mxu0 0.0
        %1533 = vmatpush2.msra.mxu0 0.0
        %1534 = vmatprep.subr.mxu0 0.0
        %1535 = vmatpush2.msra.mxu0 0.0
        %1536 = vmatprep.subr.mxu0 0.0
        %1537 = vmatpush2.msra.mxu0 0.0
        %1538 = vmatprep.subr.mxu0 0.0
        %1539 = vmatpush2.msra.mxu0 0.0
        %1540 = vmatprep.subr.mxu0 0.0
        %1541 = vmatpush2.msra.mxu0 0.0
        %1542 = vmatprep.subr.mxu0 0.0
        %1543 = vmatpush2.msra.mxu0 0.0
        %1544 = vmatprep.subr.mxu0 0.0
        %1545 = vmatpush2.msra.mxu0 0.0
        %1546 = vmatprep.subr.mxu0 0.0
        %1547 = vmatpush2.msra.mxu0 0.0
        %1548 = vmatprep.subr.mxu0 0.0
        %1549 = vmatpush2.msra.mxu0 0.0
        %1550 = vmatprep.subr.mxu0 0.0
        %1551 = vmatpush2.msra.mxu0 0.0
        %1552 = vmatprep.subr.mxu0 0.0
        %1553 = vmatpush2.msra.mxu0 0.0
        %1554 = vmatprep.subr.mxu0 0.0
        %1555 = vmatpush2.msra.mxu0 0.0
        %1556 = vmatprep.subr.mxu0 0.0
        %1557 = vmatpush2.msra.mxu0 0.0
        %1558 = vmatprep.subr.mxu0 0.0
        %1559 = vmatpush2.msra.mxu0 0.0
        %1560 = vmatprep.mubr.f32.mxu0 0.0
        %1561 = vmatmul.mubr.f32.gmra.mxu0 %v1414
        %v1562 = vpop.f32.mrf.mxu0
        %v1563 = vadd.f32 %v1495, %v1562
        %v1564 = vpop.f32.mrf.mxu0
        %1565 = vdwg.mxu0
        %vm1566 = vcmask 1040384
        %v1567 = vsel %vm1566, %v1563, -inf
        %1568 = vmax.xlane.f32.xlu0 %v1567
        %v1569 = vpop.xlane.xlu0 %1568
        %v1570 = vsub.f32 %v1563, %v1569
        %v1571 = vmul.f32 %v1570, 1.442695
        %v1572 = vpow.pop %v1571
        %v1573 = vsel %vm1566, %v1572, 0.0
        %1574 = vadd.xlane.f32.xlu0 %v1573
        %v1575 = vpop.xlane.xlu0 %1574
        %v1576 = vlog2.pop %v1575
        %v1577 = vmul.f32 %v1576, 0.6931472
        %v1578 = vadd.f32 %v1569, %v1577
        %v1579 = vsub.f32 %v1563, %v1578
        %1580 = vst [vmem:[%s366] sm:$0x1] %v1579
        %1581 = vmatprep.subr.mxu0 0.0
        %1582 = vmatpush1.msra.mxu0 %v1491
        %1583 = vmatprep.subr.mxu0 0.0
        %1584 = vmatpush1.msra.mxu0 %v1490
        %1585 = vmatprep.subr.mxu0 0.0
        %1586 = vmatpush1.msra.mxu0 %v1489
        %1587 = vmatprep.subr.mxu0 0.0
        %1588 = vmatpush1.msra.mxu0 %v1488
        %1589 = vmatprep.subr.mxu0 0.0
        %1590 = vmatpush1.msra.mxu0 %v1487
        %1591 = vmatprep.subr.mxu0 0.0
        %1592 = vmatpush1.msra.mxu0 %v1486
        %1593 = vmatprep.subr.mxu0 0.0
        %1594 = vmatpush1.msra.mxu0 %v1485
        %1595 = vmatprep.subr.mxu0 0.0
        %1596 = vmatpush1.msra.mxu0 %v1484
        %1597 = vmatprep.subr.mxu0 0.0
        %1598 = vmatpush1.msra.mxu0 %v1483
        %1599 = vmatprep.subr.mxu0 0.0
        %1600 = vmatpush1.msra.mxu0 %v1482
        %1601 = vmatprep.subr.mxu0 0.0
        %1602 = vmatpush1.msra.mxu0 %v1481
        %1603 = vmatprep.subr.mxu0 0.0
        %1604 = vmatpush1.msra.mxu0 %v1480
        %1605 = vmatprep.subr.mxu0 0.0
        %1606 = vmatpush1.msra.mxu0 %v1479
        %1607 = vmatprep.subr.mxu0 0.0
        %1608 = vmatpush1.msra.mxu0 %v1478
        %1609 = vmatprep.subr.mxu0 0.0
        %1610 = vmatpush1.msra.mxu0 %v1477
        %1611 = vmatprep.subr.mxu0 0.0
        %1612 = vmatpush1.msra.mxu0 %v1476
        %1613 = vmatprep.subr.mxu0 0.0
        %1614 = vmatpush2.msra.mxu0 0.0
        %1615 = vmatprep.subr.mxu0 0.0
        %1616 = vmatpush2.msra.mxu0 0.0
        %1617 = vmatprep.subr.mxu0 0.0
        %1618 = vmatpush2.msra.mxu0 0.0
        %1619 = vmatprep.subr.mxu0 0.0
        %1620 = vmatpush2.msra.mxu0 0.0
        %1621 = vmatprep.subr.mxu0 0.0
        %1622 = vmatpush2.msra.mxu0 0.0
        %1623 = vmatprep.subr.mxu0 0.0
        %1624 = vmatpush2.msra.mxu0 0.0
        %1625 = vmatprep.subr.mxu0 0.0
        %1626 = vmatpush2.msra.mxu0 0.0
        %1627 = vmatprep.subr.mxu0 0.0
        %1628 = vmatpush2.msra.mxu0 0.0
        %1629 = vmatprep.subr.mxu0 0.0
        %1630 = vmatpush2.msra.mxu0 0.0
        %1631 = vmatprep.subr.mxu0 0.0
        %1632 = vmatpush2.msra.mxu0 0.0
        %1633 = vmatprep.subr.mxu0 0.0
        %1634 = vmatpush2.msra.mxu0 0.0
        %1635 = vmatprep.subr.mxu0 0.0
        %1636 = vmatpush2.msra.mxu0 0.0
        %1637 = vmatprep.subr.mxu0 0.0
        %1638 = vmatpush2.msra.mxu0 0.0
        %1639 = vmatprep.subr.mxu0 0.0
        %1640 = vmatpush2.msra.mxu0 0.0
        %1641 = vmatprep.subr.mxu0 0.0
        %1642 = vmatpush2.msra.mxu0 0.0
        %1643 = vmatprep.subr.mxu0 0.0
        %1644 = vmatpush2.msra.mxu0 0.0
        %1645 = vmatprep.mubr.f32.mxu0 0.0
        %1646 = vmatmul.mubr.f32.gmra.mxu0 %v1455
        %v1647 = vpop.f32.mrf.mxu0
        %v1648 = vadd.f32 %v1495, %v1647
        %v1649 = vpop.f32.mrf.mxu0
        %1650 = vdwg.mxu0
        %v1651 = vsel %vm1566, %v1648, -inf
        %1652 = vmax.xlane.f32.xlu0 %v1651
        %v1653 = vpop.xlane.xlu0 %1652
        %v1654 = vsub.f32 %v1648, %v1653
        %v1655 = vmul.f32 %v1654, 1.442695
        %v1656 = vpow.pop %v1655
        %v1657 = vsel %vm1566, %v1656, 0.0
        %1658 = vadd.xlane.f32.xlu0 %v1657
        %v1659 = vpop.xlane.xlu0 %1658
        %v1660 = vlog2.pop %v1659
        %v1661 = vmul.f32 %v1660, 0.6931472
        %v1662 = vadd.f32 %v1653, %v1661
        %v1663 = vsub.f32 %v1648, %v1662
        %1664 = vst [vmem:[%s372] sm:$0x1] %v1663
        %s1665 = sand.u32 %s235, 1
        %s1666 = scalar_lea.sflag [#allocation3], %s1665
        %s1667 = sand.u32 %s235, 1
        %s1668 = scalar_lea.vmem [#allocation2], %s1667
        %s1669 = sand.u32 %s261, 1
        %s1670 = scalar_lea.sflag [#allocation5], %s1669
        %s1671 = sand.u32 %s261, 1
        %s1672 = scalar_lea.vmem [#allocation4], %s1671
        // Predicated region
        $region57: #{roberta_mrc_forward.1} parent=55 // pred_check
          %p1673 = pneg %p245
        $region58: #{roberta_mrc_forward.1} parent=55 // pred_check_branch
          %1675 = sbr.rel (%p1673) target = $region60
        $region59: #{roberta_mrc_forward.1} parent=55 // pred_region
          %s1677 = ssub.s32 16, 16
          %1678 = vsyncadd %s1666, %s1677
          %s1679 = smul.addr %s28, 16
          %s1680 = scalar_lea.hbm %s9, %s1679
          %s1682 = sshll.u32 %s1668, 4
          %s1683 = int_to_ptr.vmem [resolvable:$true] %s1682
          %1685 = dma.vmem_to_hbm [thread:$0]  %s1683, 16, %s1680, %s1666
        $region60: #{roberta_mrc_forward.1} parent=55 // pred_fallthru
          _
        // Predicated region
        $region61: #{roberta_mrc_forward.1} parent=55 // pred_check
          %p1686 = pneg %p271
        $region62: #{roberta_mrc_forward.1} parent=55 // pred_check_branch
          %1688 = sbr.rel (%p1686) target = $region64
        $region63: #{roberta_mrc_forward.1} parent=55 // pred_region
          %s1690 = ssub.s32 16, 16
          %1691 = vsyncadd %s1670, %s1690
          %s1692 = smul.addr %s28, 16
          %s1693 = scalar_lea.hbm %s10, %s1692
          %s1695 = sshll.u32 %s1672, 4
          %s1696 = int_to_ptr.vmem [resolvable:$true] %s1695
          %1698 = dma.vmem_to_hbm [thread:$0]  %s1696, 16, %s1693, %s1670
        $region64: #{roberta_mrc_forward.1} parent=55 // pred_fallthru
          _
      $region56: #{roberta_mrc_forward.1} parent=5 // pred_fallthru
        _
      %p1699 = scmp.le.s32.totalorder 2, %s23
      // Predicated region
      $region65: #{roberta_mrc_forward.1} parent=5 // pred_check
        %p1700 = pneg %p1699
      $region66: #{roberta_mrc_forward.1} parent=5 // pred_check_branch
        %1702 = sbr.rel (%p1700) target = $region68
      $region67: #{roberta_mrc_forward.1} parent=5 // pred_region
        %s1703 = ssub.s32 %s23, 2
        // Predicated region
        $region69: #{roberta_mrc_forward.1} parent=67 // pred_check
          %p1704 = pneg %p251
        $region70: #{roberta_mrc_forward.1} parent=67 // pred_check_branch
          %1706 = sbr.rel (%p1704) target = $region72
        $region71: #{roberta_mrc_forward.1} parent=67 // pred_region
          %s1707 = sand.u32 %s236, 1
          %s1708 = scalar_lea.sflag [#allocation3], %s1707
          %s1709 = sand.u32 %s236, 1
          %s1710 = scalar_lea.vmem [#allocation2], %s1709
          %1711 = dma.done %s1708, 16
        $region72: #{roberta_mrc_forward.1} parent=67 // pred_fallthru
          _
        // Predicated region
        $region73: #{roberta_mrc_forward.1} parent=67 // pred_check
          %p1712 = pneg %p277
        $region74: #{roberta_mrc_forward.1} parent=67 // pred_check_branch
          %1714 = sbr.rel (%p1712) target = $region76
        $region75: #{roberta_mrc_forward.1} parent=67 // pred_region
          %s1715 = sand.u32 %s262, 1
          %s1716 = scalar_lea.sflag [#allocation5], %s1715
          %s1717 = sand.u32 %s262, 1
          %s1718 = scalar_lea.vmem [#allocation4], %s1717
          %1719 = dma.done %s1716, 16
        $region76: #{roberta_mrc_forward.1} parent=67 // pred_fallthru
          _
      $region68: #{roberta_mrc_forward.1} parent=5 // pred_fallthru
        _
    $region6: #{roberta_mrc_forward.1} parent=1 // loop_footer
      %s27 = sadd.s32 1, %s23
    $region7: #{roberta_mrc_forward.1} parent=1 // loop_footer_branch
      %22 = sbr.rel target = $region3
    $region8: #{roberta_mrc_forward.1} parent=1 // loop_exit
      _
    %1720 = vsyncpa [#allocation3], 1
    %s1721 = scalar_lea.sflag [#allocation3], 1
    %1722 = vsyncpa %s1721, 1
    %1723 = vsyncpa [#allocation5], 1
    %s1724 = scalar_lea.sflag [#allocation5], 1
    %1725 = vsyncpa %s1724, 1

</llo_original>
